<compile_context>
chip_gen: v7x
topology: tpu7x:2x2x1
jax: 0.10.0
libtpu: 0.0.40
codegen_flags: <defaults>
</compile_context>

<pallas_src>
import math
import functools

import jax
import jax.numpy as jnp
from jax.experimental import pallas as pl
from jax.experimental.pallas import tpu as pltpu


# ----------------------------- helpers ---------------------------------------

def _row_tile(n, cap=512):
    """Largest 'nice' row tile that divides n (full array if n is small)."""
    if n <= cap:
        return n
    for t in (512, 256, 128, 64, 32, 16, 8):
        if n % t == 0:
            return t
    return n


def _clamp_vmem(estimate_bytes):
    return int(min(max(estimate_bytes, 32 * 1024 * 1024), 96 * 1024 * 1024))


# ----------------------------- Pallas kernels --------------------------------

def _attn_ln_kernel(*refs, num_heads, head_dim, add_residual, add_pe, eps):
    """One (batch, q-row-tile) block:
       out = LN(residual + OutProj(MHA(q_tok[+q_pe], k_tok[+k_pe], v_tok)))."""
    it = iter(refs)
    qt_ref = next(it)
    qpe_ref = next(it) if add_pe else None
    kt_ref = next(it)
    kpe_ref = next(it) if add_pe else None
    vt_ref = next(it)
    res_ref = next(it) if add_residual else None
    (wq_ref, bq_ref, wk_ref, bk_ref, wv_ref, bv_ref,
     wo_ref, bo_ref, g_ref, beta_ref, o_ref,
     qh_scr, kh_scr, vh_scr, oh_scr) = it

    # PE add in f32, then cast matmul operands to bf16 (MXU-native).
    q_in = qt_ref[...] + qpe_ref[...] if add_pe else qt_ref[...]
    k_in = kt_ref[...] + kpe_ref[...] if add_pe else kt_ref[...]
    v_in = vt_ref[...]
    q_b = q_in.astype(jnp.bfloat16)
    k_b = k_in.astype(jnp.bfloat16)
    v_b = v_in.astype(jnp.bfloat16)

    # Head-major projections (weights pre-reshaped at init to (H, C, Dh), 1/sqrt(Dh)
    # folded into Wq/bq).  Full-width activations, leading-axis scratch stores:
    # no lane-sliced activation reads.
    for h in range(num_heads):
        qh_scr[h] = jnp.dot(q_b, wq_ref[h],
                            preferred_element_type=jnp.float32) + bq_ref[h]
        kh_scr[h] = jnp.dot(k_b, wk_ref[h],
                            preferred_element_type=jnp.float32) + bk_ref[h]
        vh_scr[h] = jnp.dot(v_b, wv_ref[h],
                            preferred_element_type=jnp.float32) + bv_ref[h]

    qh = qh_scr[...].astype(jnp.bfloat16)           # (H, Tq, Dh)
    kh = kh_scr[...].astype(jnp.bfloat16)           # (H, Nk, Dh)
    vh = vh_scr[...].astype(jnp.bfloat16)           # (H, Nk, Dh)

    # Batched per-head attention: one dot_general for scores, one for PV.
    s = jnp.einsum('hqd,hkd->hqk', qh, kh,
                   preferred_element_type=jnp.float32)            # (H, Tq, Nk) f32
    m = jnp.max(s, axis=-1, keepdims=True)
    p = jnp.exp(s - m)                                            # f32 exp (EUP)
    l = jnp.sum(p, axis=-1, keepdims=True)
    oh = jnp.einsum('hqk,hkd->hqd', p.astype(jnp.bfloat16), vh,
                    preferred_element_type=jnp.float32)
    oh = oh * pl.reciprocal(l, approx=True)                       # (H, Tq, Dh) f32
    oh_b = oh.astype(jnp.bfloat16)

    # Merge heads into the (Tq, internal) scratch, then ONE K=internal out-proj matmul.
    for h in range(num_heads):
        oh_scr[:, h * head_dim:(h + 1) * head_dim] = oh_b[h]
    attn_out = jnp.dot(oh_scr[...], wo_ref[...],
                       preferred_element_type=jnp.float32) + bo_ref[...]

    x = res_ref[...] + attn_out if add_residual else attn_out
    mu = jnp.mean(x, axis=-1, keepdims=True)
    xc = x - mu
    var = jnp.mean(xc * xc, axis=-1, keepdims=True)
    o_ref[...] = xc * jax.lax.rsqrt(var + eps) * g_ref[...] + beta_ref[...]


def _mlp_ln_kernel(x_ref, w1_ref, b1_ref, w2_ref, b2_ref, g_ref, beta_ref,
                   o_ref, *, eps):
    """One row tile (batch folded into rows): out = LN(x + W2 @ relu(W1 @ x))."""
    x = x_ref[...]                                  # (Tr, E) f32
    h = jnp.dot(x.astype(jnp.bfloat16), w1_ref[...],
                preferred_element_type=jnp.float32) + b1_ref[...]
    h = jnp.maximum(h, 0.0)
    y = jnp.dot(h.astype(jnp.bfloat16), w2_ref[...],
                preferred_element_type=jnp.float32) + b2_ref[...]
    z = x + y
    mu = jnp.mean(z, axis=-1, keepdims=True)
    zc = z - mu
    var = jnp.mean(zc * zc, axis=-1, keepdims=True)
    o_ref[...] = zc * jax.lax.rsqrt(var + eps) * g_ref[...] + beta_ref[...]


# ----------------------------- pallas_call wrappers ---------------------------

def fused_attn_ln(q_tok, q_pe, k_tok, k_pe, v_tok, residual, params, ln,
                  *, num_heads, add_residual, add_pe):
    """Fused PE-add + bf16 QKV proj + per-head softmax attention + merged out-proj
    + residual + LayerNorm.  Grid = (batch, q-row-tile), both parallel."""
    B, Nq, Cq = q_tok.shape
    _, Nk, Ck = k_tok.shape
    internal, E = params['wo'].shape
    head_dim = internal // num_heads
    gamma, beta = ln

    tq = _row_tile(Nq)
    grid = (B, Nq // tq)

    def q_spec(c):
        return pl.BlockSpec((None, tq, c), lambda b, qi: (b, qi, 0))

    def kv_spec(c):
        return pl.BlockSpec((None, Nk, c), lambda b, qi: (b, 0, 0))

    def w_spec(w):
        nd = w.ndim
        return pl.BlockSpec(w.shape, lambda b, qi: (0,) * nd)

    inputs, in_specs = [], []

    def add(arr, spec):
        inputs.append(arr)
        in_specs.append(spec)

    add(q_tok, q_spec(Cq))
    if add_pe:
        add(q_pe, q_spec(Cq))
    add(k_tok, kv_spec(Ck))
    if add_pe:
        add(k_pe, kv_spec(Ck))
    add(v_tok, kv_spec(Ck))
    if add_residual:
        add(residual, q_spec(E))
    for name in ('wq3', 'bq3', 'wk3', 'bk3', 'wv3', 'bv3', 'wo', 'bo'):
        add(params[name], w_spec(params[name]))
    add(gamma, w_spec(gamma))
    add(beta, w_spec(beta))

    # Explicit scoped-VMEM budget from the chosen block sizes (item 6 of the review).
    io_block_bytes = (tq * Cq + 2 * Nk * Ck + tq * E) * 4
    if add_pe:
        io_block_bytes += (tq * Cq + Nk * Ck) * 4
    if add_residual:
        io_block_bytes += tq * E * 4
    w_bytes = sum(int(v.size) * int(v.dtype.itemsize) for v in params.values())
    w_bytes += int(gamma.size + beta.size) * 4
    inter_bytes = (num_heads * (tq + 2 * Nk) * head_dim * 4   # qh/kh/vh scratch
                   + 2 * num_heads * tq * Nk * 4              # scores + probs
                   + tq * internal * 2                        # merged-head scratch
                   + 2 * tq * E * 4)                          # attn_out / LN temps
    vmem_limit = _clamp_vmem(3 * io_block_bytes + 2 * w_bytes + 2 * inter_bytes)

    kernel = functools.partial(_attn_ln_kernel, num_heads=num_heads,
                               head_dim=head_dim, add_residual=add_residual,
                               add_pe=add_pe, eps=1e-5)
    return pl.pallas_call(
        kernel,
        out_shape=jax.ShapeDtypeStruct((B, Nq, E), jnp.float32),
        grid=grid,
        in_specs=in_specs,
        out_specs=pl.BlockSpec((None, tq, E), lambda b, qi: (b, qi, 0)),
        scratch_shapes=[
            pltpu.VMEM((num_heads, tq, head_dim), jnp.float32),
            pltpu.VMEM((num_heads, Nk, head_dim), jnp.float32),
            pltpu.VMEM((num_heads, Nk, head_dim), jnp.float32),
            pltpu.VMEM((tq, internal), jnp.bfloat16),
        ],
        compiler_params=pltpu.CompilerParams(
            dimension_semantics=("parallel", "parallel"),
            vmem_limit_bytes=vmem_limit),
    )(*inputs)


def fused_mlp_ln(x, mlp, ln):
    """Fused MLP + residual + LayerNorm.  Batch folded into rows, grid over row tiles."""
    B, N, E = x.shape
    gamma, beta = ln
    rows = B * N
    x2 = x.reshape(rows, E)
    tr = _row_tile(rows)
    hidden = mlp['w1'].shape[1]

    w_bytes = sum(int(v.size) * int(v.dtype.itemsize) for v in mlp.values())
    w_bytes += int(gamma.size + beta.size) * 4
    inter_bytes = 2 * tr * hidden * 4 + 2 * tr * E * 4
    vmem_limit = _clamp_vmem(3 * (2 * tr * E * 4) + 2 * w_bytes + 2 * inter_bytes)

    kernel = functools.partial(_mlp_ln_kernel, eps=1e-5)
    out2 = pl.pallas_call(
        kernel,
        out_shape=jax.ShapeDtypeStruct((rows, E), jnp.float32),
        grid=(rows // tr,),
        in_specs=[
            pl.BlockSpec((tr, E), lambda r: (r, 0)),
            pl.BlockSpec(mlp['w1'].shape, lambda r: (0, 0)),
            pl.BlockSpec(mlp['b1'].shape, lambda r: (0, 0)),
            pl.BlockSpec(mlp['w2'].shape, lambda r: (0, 0)),
            pl.BlockSpec(mlp['b2'].shape, lambda r: (0, 0)),
            pl.BlockSpec(gamma.shape, lambda r: (0, 0)),
            pl.BlockSpec(beta.shape, lambda r: (0, 0)),
        ],
        out_specs=pl.BlockSpec((tr, E), lambda r: (r, 0)),
        compiler_params=pltpu.CompilerParams(
            dimension_semantics=("parallel",),
            vmem_limit_bytes=vmem_limit),
    )(x2, mlp['w1'], mlp['b1'], mlp['w2'], mlp['b2'], gamma, beta)
    return out2.reshape(B, N, E)


# ----------------------------- Module wrapper ---------------------------------

class TwoWayAttentionBlockPallas:
    def __init__(self, embedding_dim, num_heads, mlp_dim=2048,
                 attention_downsample_rate=2, skip_first_layer_pe=False, key=None):
        self.embedding_dim = embedding_dim
        self.num_heads = num_heads
        self.mlp_dim = mlp_dim
        self.skip_first_layer_pe = skip_first_layer_pe

        if key is None:
            key = jax.random.PRNGKey(0)
        ks = jax.random.split(key, 9)
        E = embedding_dim
        s = 0.05

        def linear(kk, fi, fo):
            k1, k2 = jax.random.split(kk)
            return (jax.random.normal(k1, (fi, fo), jnp.float32) * s,
                    jax.random.normal(k2, (1, fo), jnp.float32) * s)

        def attn_params(kk, downsample):
            internal = E // downsample
            assert internal % num_heads == 0
            k1, k2, k3, k4 = jax.random.split(kk, 4)
            wq, bq = linear(k1, E, internal)
            wk, bk = linear(k2, E, internal)
            wv, bv = linear(k3, E, internal)
            wo, bo = linear(k4, internal, E)
            return {'wq': wq, 'bq': bq, 'wk': wk, 'bk': bk,
                    'wv': wv, 'bv': bv, 'wo': wo, 'bo': bo}

        # raw f32 weights (used by the mixed-precision reference)
        self.self_attn = attn_params(ks[0], 1)
        self.cross_t2i = attn_params(ks[1], attention_downsample_rate)
        self.cross_i2t = attn_params(ks[2], attention_downsample_rate)

        # kernel weights: head-major, bf16, 1/sqrt(head_dim) folded into Wq/bq
        def kernel_attn_params(p):
            internal = p['wq'].shape[1]
            dh = internal // num_heads
            scale = 1.0 / math.sqrt(dh)

            def head_major(w):          # (C, internal) -> (H, C, dh), bf16
                C = w.shape[0]
                return jnp.transpose(w.reshape(C, num_heads, dh),
                                     (1, 0, 2)).astype(jnp.bfloat16)

            def head_bias(b):           # (1, internal) -> (H, 1, dh), f32
                return b.reshape(num_heads, dh)[:, None, :]

            return {'wq3': head_major(p['wq'] * scale),
                    'bq3': head_bias(p['bq'] * scale),
                    'wk3': head_major(p['wk']), 'bk3': head_bias(p['bk']),
                    'wv3': head_major(p['wv']), 'bv3': head_bias(p['bv']),
                    'wo': p['wo'].astype(jnp.bfloat16), 'bo': p['bo']}

        self.self_attn_k = kernel_attn_params(self.self_attn)
        self.cross_t2i_k = kernel_attn_params(self.cross_t2i)
        self.cross_i2t_k = kernel_attn_params(self.cross_i2t)

        w1, b1 = linear(ks[3], E, mlp_dim)
        w2, b2 = linear(ks[4], mlp_dim, E)
        self.mlp = {'w1': w1, 'b1': b1, 'w2': w2, 'b2': b2}
        self.mlp_k = {'w1': w1.astype(jnp.bfloat16), 'b1': b1,
                      'w2': w2.astype(jnp.bfloat16), 'b2': b2}

        def ln_params(kk):
            k1, k2 = jax.random.split(kk)
            g = 1.0 + 0.1 * jax.random.normal(k1, (1, E), jnp.float32)
            b = 0.1 * jax.random.normal(k2, (1, E), jnp.float32)
            return (g, b)

        self.norm1 = ln_params(ks[5])
        self.norm2 = ln_params(ks[6])
        self.norm3 = ln_params(ks[7])
        self.norm4 = ln_params(ks[8])

    def __call__(self, queries, keys, query_pe, key_pe):
        H = self.num_heads

        # (1) self-attention on sparse tokens (+ residual + norm1, fused)
        if self.skip_first_layer_pe:
            queries = fused_attn_ln(queries, None, queries, None, queries, None,
                                    self.self_attn_k, self.norm1,
                                    num_heads=H, add_residual=False, add_pe=False)
        else:
            queries = fused_attn_ln(queries, query_pe, queries, query_pe, queries,
                                    queries, self.self_attn_k, self.norm1,
                                    num_heads=H, add_residual=True, add_pe=True)

        # (2) cross attention, tokens -> image (+ residual + norm2, fused)
        queries = fused_attn_ln(queries, query_pe, keys, key_pe, keys, queries,
                                self.cross_t2i_k, self.norm2,
                                num_heads=H, add_residual=True, add_pe=True)

        # (3) MLP (+ residual + norm3, fused; batch folded into rows)
        queries = fused_mlp_ln(queries, self.mlp_k, self.norm3)

        # (4) cross attention, image -> tokens (+ residual + norm4, fused)
        #     PyTorch: attn(q=keys+key_pe, k=queries+query_pe, v=queries)
        keys = fused_attn_ln(keys, key_pe, queries, query_pe, queries, keys,
                             self.cross_i2t_k, self.norm4,
                             num_heads=H, add_residual=True, add_pe=True)
        return queries, keys


# -------------------- Pure-JAX reference (same mixed precision) ----------------

def _mm(a, b):
    """bf16 x bf16 -> f32 matmul, mirroring the kernel's MXU precision."""
    return jnp.dot(a.astype(jnp.bfloat16), b.astype(jnp.bfloat16),
                   preferred_element_type=jnp.float32)


def _ref_attention(p, q, k, v, num_heads):
    internal = p['wq'].shape[1]
    dh = internal // num_heads
    scale = 1.0 / math.sqrt(dh)
    B, Nq, _ = q.shape
    Nk = k.shape[1]
    qp = _mm(q, p['wq'] * scale) + p['bq'] * scale
    kp = _mm(k, p['wk']) + p['bk']
    vp = _mm(v, p['wv']) + p['bv']
    qh = qp.reshape(B, Nq, num_heads, dh).transpose(0, 2, 1, 3)
    kh = kp.reshape(B, Nk, num_heads, dh).transpose(0, 2, 1, 3)
    vh = vp.reshape(B, Nk, num_heads, dh).transpose(0, 2, 1, 3)
    s = jnp.einsum('bhqd,bhkd->bhqk', qh.astype(jnp.bfloat16),
                   kh.astype(jnp.bfloat16), preferred_element_type=jnp.float32)
    m = jnp.max(s, axis=-1, keepdims=True)
    pr = jnp.exp(s - m)
    l = jnp.sum(pr, axis=-1, keepdims=True)
    oh = jnp.einsum('bhqk,bhkd->bhqd', pr.astype(jnp.bfloat16),
                    vh.astype(jnp.bfloat16),
                    preferred_element_type=jnp.float32) / l
    o = oh.transpose(0, 2, 1, 3).reshape(B, Nq, internal)
    return _mm(o, p['wo']) + p['bo']


def _ref_ln(x, g, b, eps=1e-5):
    mu = x.mean(-1, keepdims=True)
    var = ((x - mu) ** 2).mean(-1, keepdims=True)
    return (x - mu) / jnp.sqrt(var + eps) * g + b


def reference_forward(blk, queries, keys, query_pe, key_pe):
    H = blk.num_heads
    if blk.skip_first_layer_pe:
        queries = _ref_attention(blk.self_attn, queries, queries, queries, H)
    else:
        q = queries + query_pe
        attn_out = _ref_attention(blk.self_attn, q, q, queries, H)
        queries = queries + attn_out
    queries = _ref_ln(queries, *blk.norm1)

    q = queries + query_pe
    k = keys + key_pe
    attn_out = _ref_attention(blk.cross_t2i, q, k, keys, H)
    queries = queries + attn_out
    queries = _ref_ln(queries, *blk.norm2)

    h = jnp.maximum(_mm(queries, blk.mlp['w1']) + blk.mlp['b1'], 0.0)
    mlp_out = _mm(h, blk.mlp['w2']) + blk.mlp['b2']
    queries = queries + mlp_out
    queries = _ref_ln(queries, *blk.norm3)

    q = queries + query_pe
    k = keys + key_pe
    attn_out = _ref_attention(blk.cross_i2t, k, q, queries, H)
    keys = keys + attn_out
    keys = _ref_ln(keys, *blk.norm4)
    return queries, keys


# ----------------------------------- main --------------------------------------

if __name__ == "__main__":
    key = jax.random.PRNGKey(0)
    kq, kk, kqp, kkp, kmod = jax.random.split(key, 5)

    # small shapes: batch=2, 8 sparse tokens, 64 image tokens (8x8), embed=32,
    # 4 heads (self head_dim=8; cross internal=16, head_dim=4), mlp hidden=64.
    B, Nq, Nk, E, H, MLP = 2, 8, 64, 32, 4, 64

    queries = jax.random.normal(kq, (B, Nq, E), jnp.float32)
    keys = jax.random.normal(kk, (B, Nk, E), jnp.float32)
    query_pe = jax.random.normal(kqp, (B, Nq, E), jnp.float32)
    key_pe = jax.random.normal(kkp, (B, Nk, E), jnp.float32)

    blk = TwoWayAttentionBlockPallas(embedding_dim=E, num_heads=H, mlp_dim=MLP,
                                     attention_downsample_rate=2,
                                     skip_first_layer_pe=False, key=kmod)

    q_out, k_out = blk(queries, keys, query_pe, key_pe)
    q_out = jax.block_until_ready(q_out)
    k_out = jax.block_until_ready(k_out)

    q_ref, k_ref = reference_forward(blk, queries, keys, query_pe, key_pe)

    assert q_out.shape == (B, Nq, E) and k_out.shape == (B, Nk, E)
    assert bool(jnp.all(jnp.isfinite(q_out))) and bool(jnp.all(jnp.isfinite(k_out)))
    err_q = float(jnp.max(jnp.abs(q_out - q_ref)))
    err_k = float(jnp.max(jnp.abs(k_out - k_ref)))
    # kernel and reference use identical bf16/f32 mixed precision; the residual
    # difference is the approx reciprocal in the softmax denominator (~1e-3 level).
    assert err_q < 2e-2 and err_k < 2e-2, (err_q, err_k)
    print("KERNEL_OK")
</pallas_src>

<mosaic_0001>
module attributes {stable_mosaic.version = 11 : i64} {
  func.func @_attn_ln_kernel(%arg0: i32, %arg1: i32, %arg2: memref<1x8x32xf32, #tpu.memory_space<vmem>>, %arg3: memref<1x8x32xf32, #tpu.memory_space<vmem>>, %arg4: memref<1x8x32xf32, #tpu.memory_space<vmem>>, %arg5: memref<1x8x32xf32, #tpu.memory_space<vmem>>, %arg6: memref<1x8x32xf32, #tpu.memory_space<vmem>>, %arg7: memref<1x8x32xf32, #tpu.memory_space<vmem>>, %arg8: memref<4x32x8xbf16, #tpu.memory_space<vmem>>, %arg9: memref<4x1x8xf32, #tpu.memory_space<vmem>>, %arg10: memref<4x32x8xbf16, #tpu.memory_space<vmem>>, %arg11: memref<4x1x8xf32, #tpu.memory_space<vmem>>, %arg12: memref<4x32x8xbf16, #tpu.memory_space<vmem>>, %arg13: memref<4x1x8xf32, #tpu.memory_space<vmem>>, %arg14: memref<32x32xbf16, #tpu.memory_space<vmem>>, %arg15: memref<1x32xf32, #tpu.memory_space<vmem>>, %arg16: memref<1x32xf32, #tpu.memory_space<vmem>>, %arg17: memref<1x32xf32, #tpu.memory_space<vmem>>, %arg18: memref<1x8x32xf32, #tpu.memory_space<vmem>>, %arg19: memref<4x8x8xf32, #tpu.memory_space<vmem>>, %arg20: memref<4x8x8xf32, #tpu.memory_space<vmem>>, %arg21: memref<4x8x8xf32, #tpu.memory_space<vmem>>, %arg22: memref<8x32xbf16, #tpu.memory_space<vmem>>) attributes {dimension_semantics = [#tpu.dimension_semantics<parallel>, #tpu.dimension_semantics<parallel>], iteration_bounds = array<i64: 2, 1>, scalar_prefetch = 0 : i64, scratch_operands = 4 : i64, tpu.core_type = #tpu.core_type<tc>, window_params = [{transform_indices = @transform_0, window_bounds = array<i64: 1, 8, 32>}, {transform_indices = @transform_1, window_bounds = array<i64: 1, 8, 32>}, {transform_indices = @transform_2, window_bounds = array<i64: 1, 8, 32>}, {transform_indices = @transform_3, window_bounds = array<i64: 1, 8, 32>}, {transform_indices = @transform_4, window_bounds = array<i64: 1, 8, 32>}, {transform_indices = @transform_5, window_bounds = array<i64: 1, 8, 32>}, {pipeline_mode = #tpu.pipeline_mode<synchronous>, transform_indices = @transform_6, window_bounds = array<i64: 4, 32, 8>}, {pipeline_mode = #tpu.pipeline_mode<synchronous>, transform_indices = @transform_7, window_bounds = array<i64: 4, 1, 8>}, {pipeline_mode = #tpu.pipeline_mode<synchronous>, transform_indices = @transform_8, window_bounds = array<i64: 4, 32, 8>}, {pipeline_mode = #tpu.pipeline_mode<synchronous>, transform_indices = @transform_9, window_bounds = array<i64: 4, 1, 8>}, {pipeline_mode = #tpu.pipeline_mode<synchronous>, transform_indices = @transform_10, window_bounds = array<i64: 4, 32, 8>}, {pipeline_mode = #tpu.pipeline_mode<synchronous>, transform_indices = @transform_11, window_bounds = array<i64: 4, 1, 8>}, {pipeline_mode = #tpu.pipeline_mode<synchronous>, transform_indices = @transform_12, window_bounds = array<i64: 32, 32>}, {pipeline_mode = #tpu.pipeline_mode<synchronous>, transform_indices = @transform_13, window_bounds = array<i64: 1, 32>}, {pipeline_mode = #tpu.pipeline_mode<synchronous>, transform_indices = @transform_14, window_bounds = array<i64: 1, 32>}, {pipeline_mode = #tpu.pipeline_mode<synchronous>, transform_indices = @transform_15, window_bounds = array<i64: 1, 32>}, {transform_indices = @transform_16, window_bounds = array<i64: 1, 8, 32>}]} {
    %c0 = arith.constant 0 : index
    %c0_0 = arith.constant 0 : index
    %c0_1 = arith.constant 0 : index
    %0 = vector.load %arg2[%c0, %c0_0, %c0_1] : memref<1x8x32xf32, #tpu.memory_space<vmem>>, vector<1x8x32xf32>
    %1 = vector.shape_cast %0 : vector<1x8x32xf32> to vector<8x32xf32>
    %c0_2 = arith.constant 0 : index
    %c0_3 = arith.constant 0 : index
    %c0_4 = arith.constant 0 : index
    %2 = vector.load %arg3[%c0_2, %c0_3, %c0_4] : memref<1x8x32xf32, #tpu.memory_space<vmem>>, vector<1x8x32xf32>
    %3 = vector.shape_cast %2 : vector<1x8x32xf32> to vector<8x32xf32>
    %4 = arith.addf %1, %3 : vector<8x32xf32>
    %c0_5 = arith.constant 0 : index
    %c0_6 = arith.constant 0 : index
    %c0_7 = arith.constant 0 : index
    %5 = vector.load %arg4[%c0_5, %c0_6, %c0_7] : memref<1x8x32xf32, #tpu.memory_space<vmem>>, vector<1x8x32xf32>
    %6 = vector.shape_cast %5 : vector<1x8x32xf32> to vector<8x32xf32>
    %c0_8 = arith.constant 0 : index
    %c0_9 = arith.constant 0 : index
    %c0_10 = arith.constant 0 : index
    %7 = vector.load %arg5[%c0_8, %c0_9, %c0_10] : memref<1x8x32xf32, #tpu.memory_space<vmem>>, vector<1x8x32xf32>
    %8 = vector.shape_cast %7 : vector<1x8x32xf32> to vector<8x32xf32>
    %9 = arith.addf %6, %8 : vector<8x32xf32>
    %c0_11 = arith.constant 0 : index
    %c0_12 = arith.constant 0 : index
    %c0_13 = arith.constant 0 : index
    %10 = vector.load %arg6[%c0_11, %c0_12, %c0_13] : memref<1x8x32xf32, #tpu.memory_space<vmem>>, vector<1x8x32xf32>
    %11 = vector.shape_cast %10 : vector<1x8x32xf32> to vector<8x32xf32>
    %12 = arith.truncf %4 : vector<8x32xf32> to vector<8x32xbf16>
    %13 = arith.truncf %9 : vector<8x32xf32> to vector<8x32xbf16>
    %14 = arith.truncf %11 : vector<8x32xf32> to vector<8x32xbf16>
    %c0_14 = arith.constant 0 : index
    %c0_15 = arith.constant 0 : index
    %c0_16 = arith.constant 0 : index
    %15 = vector.load %arg8[%c0_14, %c0_15, %c0_16] : memref<4x32x8xbf16, #tpu.memory_space<vmem>>, vector<1x32x8xbf16>
    %16 = vector.shape_cast %15 : vector<1x32x8xbf16> to vector<32x8xbf16>
    %cst = arith.constant dense<0.000000e+00> : vector<8x8xf32>
    %17 = tpu.matmul %12, %16, %cst {dimension_numbers = #tpu.dot_dimension_numbers<[1], [0], [0], [1], [0, 0, 1, 1], [], []>} : vector<8x32xbf16>, vector<32x8xbf16>, vector<8x8xf32> -> vector<8x8xf32>
    %c0_17 = arith.constant 0 : index
    %c0_18 = arith.constant 0 : index
    %c0_19 = arith.constant 0 : index
    %18 = vector.load %arg9[%c0_17, %c0_18, %c0_19] : memref<4x1x8xf32, #tpu.memory_space<vmem>>, vector<1x1x8xf32>
    %19 = vector.shape_cast %18 : vector<1x1x8xf32> to vector<1x8xf32>
    %20 = vector.broadcast %19 : vector<1x8xf32> to vector<8x8xf32>
    %21 = arith.addf %17, %20 : vector<8x8xf32>
    %c0_20 = arith.constant 0 : index
    %c0_21 = arith.constant 0 : index
    %c0_22 = arith.constant 0 : index
    %22 = vector.load %arg19[%c0_20, %c0_21, %c0_22] : memref<4x8x8xf32, #tpu.memory_space<vmem>>, vector<1x8x8xf32>
    %23 = vector.shape_cast %22 : vector<1x8x8xf32> to vector<8x8xf32>
    %24 = vector.shape_cast %21 : vector<8x8xf32> to vector<1x8x8xf32>
    tpu.vector_store %arg19[%c0_20, %c0_21, %c0_22], %24 {strides = array<i32>} : memref<4x8x8xf32, #tpu.memory_space<vmem>>, vector<1x8x8xf32>,
    %c0_23 = arith.constant 0 : index
    %c0_24 = arith.constant 0 : index
    %c0_25 = arith.constant 0 : index
    %25 = vector.load %arg10[%c0_23, %c0_24, %c0_25] : memref<4x32x8xbf16, #tpu.memory_space<vmem>>, vector<1x32x8xbf16>
    %26 = vector.shape_cast %25 : vector<1x32x8xbf16> to vector<32x8xbf16>
    %cst_26 = arith.constant dense<0.000000e+00> : vector<8x8xf32>
    %27 = tpu.matmul %13, %26, %cst_26 {dimension_numbers = #tpu.dot_dimension_numbers<[1], [0], [0], [1], [0, 0, 1, 1], [], []>} : vector<8x32xbf16>, vector<32x8xbf16>, vector<8x8xf32> -> vector<8x8xf32>
    %c0_27 = arith.constant 0 : index
    %c0_28 = arith.constant 0 : index
    %c0_29 = arith.constant 0 : index
    %28 = vector.load %arg11[%c0_27, %c0_28, %c0_29] : memref<4x1x8xf32, #tpu.memory_space<vmem>>, vector<1x1x8xf32>
    %29 = vector.shape_cast %28 : vector<1x1x8xf32> to vector<1x8xf32>
    %30 = vector.broadcast %29 : vector<1x8xf32> to vector<8x8xf32>
    %31 = arith.addf %27, %30 : vector<8x8xf32>
    %c0_30 = arith.constant 0 : index
    %c0_31 = arith.constant 0 : index
    %c0_32 = arith.constant 0 : index
    %32 = vector.load %arg20[%c0_30, %c0_31, %c0_32] : memref<4x8x8xf32, #tpu.memory_space<vmem>>, vector<1x8x8xf32>
    %33 = vector.shape_cast %32 : vector<1x8x8xf32> to vector<8x8xf32>
    %34 = vector.shape_cast %31 : vector<8x8xf32> to vector<1x8x8xf32>
    tpu.vector_store %arg20[%c0_30, %c0_31, %c0_32], %34 {strides = array<i32>} : memref<4x8x8xf32, #tpu.memory_space<vmem>>, vector<1x8x8xf32>,
    %c0_33 = arith.constant 0 : index
    %c0_34 = arith.constant 0 : index
    %c0_35 = arith.constant 0 : index
    %35 = vector.load %arg12[%c0_33, %c0_34, %c0_35] : memref<4x32x8xbf16, #tpu.memory_space<vmem>>, vector<1x32x8xbf16>
    %36 = vector.shape_cast %35 : vector<1x32x8xbf16> to vector<32x8xbf16>
    %cst_36 = arith.constant dense<0.000000e+00> : vector<8x8xf32>
    %37 = tpu.matmul %14, %36, %cst_36 {dimension_numbers = #tpu.dot_dimension_numbers<[1], [0], [0], [1], [0, 0, 1, 1], [], []>} : vector<8x32xbf16>, vector<32x8xbf16>, vector<8x8xf32> -> vector<8x8xf32>
    %c0_37 = arith.constant 0 : index
    %c0_38 = arith.constant 0 : index
    %c0_39 = arith.constant 0 : index
    %38 = vector.load %arg13[%c0_37, %c0_38, %c0_39] : memref<4x1x8xf32, #tpu.memory_space<vmem>>, vector<1x1x8xf32>
    %39 = vector.shape_cast %38 : vector<1x1x8xf32> to vector<1x8xf32>
    %40 = vector.broadcast %39 : vector<1x8xf32> to vector<8x8xf32>
    %41 = arith.addf %37, %40 : vector<8x8xf32>
    %c0_40 = arith.constant 0 : index
    %c0_41 = arith.constant 0 : index
    %c0_42 = arith.constant 0 : index
    %42 = vector.load %arg21[%c0_40, %c0_41, %c0_42] : memref<4x8x8xf32, #tpu.memory_space<vmem>>, vector<1x8x8xf32>
    %43 = vector.shape_cast %42 : vector<1x8x8xf32> to vector<8x8xf32>
    %44 = vector.shape_cast %41 : vector<8x8xf32> to vector<1x8x8xf32>
    tpu.vector_store %arg21[%c0_40, %c0_41, %c0_42], %44 {strides = array<i32>} : memref<4x8x8xf32, #tpu.memory_space<vmem>>, vector<1x8x8xf32>,
    %c1 = arith.constant 1 : index
    %c0_43 = arith.constant 0 : index
    %c0_44 = arith.constant 0 : index
    %45 = vector.load %arg8[%c1, %c0_43, %c0_44] : memref<4x32x8xbf16, #tpu.memory_space<vmem>>, vector<1x32x8xbf16>
    %46 = vector.shape_cast %45 : vector<1x32x8xbf16> to vector<32x8xbf16>
    %cst_45 = arith.constant dense<0.000000e+00> : vector<8x8xf32>
    %47 = tpu.matmul %12, %46, %cst_45 {dimension_numbers = #tpu.dot_dimension_numbers<[1], [0], [0], [1], [0, 0, 1, 1], [], []>} : vector<8x32xbf16>, vector<32x8xbf16>, vector<8x8xf32> -> vector<8x8xf32>
    %c1_46 = arith.constant 1 : index
    %c0_47 = arith.constant 0 : index
    %c0_48 = arith.constant 0 : index
    %48 = vector.load %arg9[%c1_46, %c0_47, %c0_48] : memref<4x1x8xf32, #tpu.memory_space<vmem>>, vector<1x1x8xf32>
    %49 = vector.shape_cast %48 : vector<1x1x8xf32> to vector<1x8xf32>
    %50 = vector.broadcast %49 : vector<1x8xf32> to vector<8x8xf32>
    %51 = arith.addf %47, %50 : vector<8x8xf32>
    %c1_49 = arith.constant 1 : index
    %c0_50 = arith.constant 0 : index
    %c0_51 = arith.constant 0 : index
    %52 = vector.load %arg19[%c1_49, %c0_50, %c0_51] : memref<4x8x8xf32, #tpu.memory_space<vmem>>, vector<1x8x8xf32>
    %53 = vector.shape_cast %52 : vector<1x8x8xf32> to vector<8x8xf32>
    %54 = vector.shape_cast %51 : vector<8x8xf32> to vector<1x8x8xf32>
    tpu.vector_store %arg19[%c1_49, %c0_50, %c0_51], %54 {strides = array<i32>} : memref<4x8x8xf32, #tpu.memory_space<vmem>>, vector<1x8x8xf32>,
    %c1_52 = arith.constant 1 : index
    %c0_53 = arith.constant 0 : index
    %c0_54 = arith.constant 0 : index
    %55 = vector.load %arg10[%c1_52, %c0_53, %c0_54] : memref<4x32x8xbf16, #tpu.memory_space<vmem>>, vector<1x32x8xbf16>
    %56 = vector.shape_cast %55 : vector<1x32x8xbf16> to vector<32x8xbf16>
    %cst_55 = arith.constant dense<0.000000e+00> : vector<8x8xf32>
    %57 = tpu.matmul %13, %56, %cst_55 {dimension_numbers = #tpu.dot_dimension_numbers<[1], [0], [0], [1], [0, 0, 1, 1], [], []>} : vector<8x32xbf16>, vector<32x8xbf16>, vector<8x8xf32> -> vector<8x8xf32>
    %c1_56 = arith.constant 1 : index
    %c0_57 = arith.constant 0 : index
    %c0_58 = arith.constant 0 : index
    %58 = vector.load %arg11[%c1_56, %c0_57, %c0_58] : memref<4x1x8xf32, #tpu.memory_space<vmem>>, vector<1x1x8xf32>
    %59 = vector.shape_cast %58 : vector<1x1x8xf32> to vector<1x8xf32>
    %60 = vector.broadcast %59 : vector<1x8xf32> to vector<8x8xf32>
    %61 = arith.addf %57, %60 : vector<8x8xf32>
    %c1_59 = arith.constant 1 : index
    %c0_60 = arith.constant 0 : index
    %c0_61 = arith.constant 0 : index
    %62 = vector.load %arg20[%c1_59, %c0_60, %c0_61] : memref<4x8x8xf32, #tpu.memory_space<vmem>>, vector<1x8x8xf32>
    %63 = vector.shape_cast %62 : vector<1x8x8xf32> to vector<8x8xf32>
    %64 = vector.shape_cast %61 : vector<8x8xf32> to vector<1x8x8xf32>
    tpu.vector_store %arg20[%c1_59, %c0_60, %c0_61], %64 {strides = array<i32>} : memref<4x8x8xf32, #tpu.memory_space<vmem>>, vector<1x8x8xf32>,
    %c1_62 = arith.constant 1 : index
    %c0_63 = arith.constant 0 : index
    %c0_64 = arith.constant 0 : index
    %65 = vector.load %arg12[%c1_62, %c0_63, %c0_64] : memref<4x32x8xbf16, #tpu.memory_space<vmem>>, vector<1x32x8xbf16>
    %66 = vector.shape_cast %65 : vector<1x32x8xbf16> to vector<32x8xbf16>
    %cst_65 = arith.constant dense<0.000000e+00> : vector<8x8xf32>
    %67 = tpu.matmul %14, %66, %cst_65 {dimension_numbers = #tpu.dot_dimension_numbers<[1], [0], [0], [1], [0, 0, 1, 1], [], []>} : vector<8x32xbf16>, vector<32x8xbf16>, vector<8x8xf32> -> vector<8x8xf32>
    %c1_66 = arith.constant 1 : index
    %c0_67 = arith.constant 0 : index
    %c0_68 = arith.constant 0 : index
    %68 = vector.load %arg13[%c1_66, %c0_67, %c0_68] : memref<4x1x8xf32, #tpu.memory_space<vmem>>, vector<1x1x8xf32>
    %69 = vector.shape_cast %68 : vector<1x1x8xf32> to vector<1x8xf32>
    %70 = vector.broadcast %69 : vector<1x8xf32> to vector<8x8xf32>
    %71 = arith.addf %67, %70 : vector<8x8xf32>
    %c1_69 = arith.constant 1 : index
    %c0_70 = arith.constant 0 : index
    %c0_71 = arith.constant 0 : index
    %72 = vector.load %arg21[%c1_69, %c0_70, %c0_71] : memref<4x8x8xf32, #tpu.memory_space<vmem>>, vector<1x8x8xf32>
    %73 = vector.shape_cast %72 : vector<1x8x8xf32> to vector<8x8xf32>
    %74 = vector.shape_cast %71 : vector<8x8xf32> to vector<1x8x8xf32>
    tpu.vector_store %arg21[%c1_69, %c0_70, %c0_71], %74 {strides = array<i32>} : memref<4x8x8xf32, #tpu.memory_space<vmem>>, vector<1x8x8xf32>,
    %c2 = arith.constant 2 : index
    %c0_72 = arith.constant 0 : index
    %c0_73 = arith.constant 0 : index
    %75 = vector.load %arg8[%c2, %c0_72, %c0_73] : memref<4x32x8xbf16, #tpu.memory_space<vmem>>, vector<1x32x8xbf16>
    %76 = vector.shape_cast %75 : vector<1x32x8xbf16> to vector<32x8xbf16>
    %cst_74 = arith.constant dense<0.000000e+00> : vector<8x8xf32>
    %77 = tpu.matmul %12, %76, %cst_74 {dimension_numbers = #tpu.dot_dimension_numbers<[1], [0], [0], [1], [0, 0, 1, 1], [], []>} : vector<8x32xbf16>, vector<32x8xbf16>, vector<8x8xf32> -> vector<8x8xf32>
    %c2_75 = arith.constant 2 : index
    %c0_76 = arith.constant 0 : index
    %c0_77 = arith.constant 0 : index
    %78 = vector.load %arg9[%c2_75, %c0_76, %c0_77] : memref<4x1x8xf32, #tpu.memory_space<vmem>>, vector<1x1x8xf32>
    %79 = vector.shape_cast %78 : vector<1x1x8xf32> to vector<1x8xf32>
    %80 = vector.broadcast %79 : vector<1x8xf32> to vector<8x8xf32>
    %81 = arith.addf %77, %80 : vector<8x8xf32>
    %c2_78 = arith.constant 2 : index
    %c0_79 = arith.constant 0 : index
    %c0_80 = arith.constant 0 : index
    %82 = vector.load %arg19[%c2_78, %c0_79, %c0_80] : memref<4x8x8xf32, #tpu.memory_space<vmem>>, vector<1x8x8xf32>
    %83 = vector.shape_cast %82 : vector<1x8x8xf32> to vector<8x8xf32>
    %84 = vector.shape_cast %81 : vector<8x8xf32> to vector<1x8x8xf32>
    tpu.vector_store %arg19[%c2_78, %c0_79, %c0_80], %84 {strides = array<i32>} : memref<4x8x8xf32, #tpu.memory_space<vmem>>, vector<1x8x8xf32>,
    %c2_81 = arith.constant 2 : index
    %c0_82 = arith.constant 0 : index
    %c0_83 = arith.constant 0 : index
    %85 = vector.load %arg10[%c2_81, %c0_82, %c0_83] : memref<4x32x8xbf16, #tpu.memory_space<vmem>>, vector<1x32x8xbf16>
    %86 = vector.shape_cast %85 : vector<1x32x8xbf16> to vector<32x8xbf16>
    %cst_84 = arith.constant dense<0.000000e+00> : vector<8x8xf32>
    %87 = tpu.matmul %13, %86, %cst_84 {dimension_numbers = #tpu.dot_dimension_numbers<[1], [0], [0], [1], [0, 0, 1, 1], [], []>} : vector<8x32xbf16>, vector<32x8xbf16>, vector<8x8xf32> -> vector<8x8xf32>
    %c2_85 = arith.constant 2 : index
    %c0_86 = arith.constant 0 : index
    %c0_87 = arith.constant 0 : index
    %88 = vector.load %arg11[%c2_85, %c0_86, %c0_87] : memref<4x1x8xf32, #tpu.memory_space<vmem>>, vector<1x1x8xf32>
    %89 = vector.shape_cast %88 : vector<1x1x8xf32> to vector<1x8xf32>
    %90 = vector.broadcast %89 : vector<1x8xf32> to vector<8x8xf32>
    %91 = arith.addf %87, %90 : vector<8x8xf32>
    %c2_88 = arith.constant 2 : index
    %c0_89 = arith.constant 0 : index
    %c0_90 = arith.constant 0 : index
    %92 = vector.load %arg20[%c2_88, %c0_89, %c0_90] : memref<4x8x8xf32, #tpu.memory_space<vmem>>, vector<1x8x8xf32>
    %93 = vector.shape_cast %92 : vector<1x8x8xf32> to vector<8x8xf32>
    %94 = vector.shape_cast %91 : vector<8x8xf32> to vector<1x8x8xf32>
    tpu.vector_store %arg20[%c2_88, %c0_89, %c0_90], %94 {strides = array<i32>} : memref<4x8x8xf32, #tpu.memory_space<vmem>>, vector<1x8x8xf32>,
    %c2_91 = arith.constant 2 : index
    %c0_92 = arith.constant 0 : index
    %c0_93 = arith.constant 0 : index
    %95 = vector.load %arg12[%c2_91, %c0_92, %c0_93] : memref<4x32x8xbf16, #tpu.memory_space<vmem>>, vector<1x32x8xbf16>
    %96 = vector.shape_cast %95 : vector<1x32x8xbf16> to vector<32x8xbf16>
    %cst_94 = arith.constant dense<0.000000e+00> : vector<8x8xf32>
    %97 = tpu.matmul %14, %96, %cst_94 {dimension_numbers = #tpu.dot_dimension_numbers<[1], [0], [0], [1], [0, 0, 1, 1], [], []>} : vector<8x32xbf16>, vector<32x8xbf16>, vector<8x8xf32> -> vector<8x8xf32>
    %c2_95 = arith.constant 2 : index
    %c0_96 = arith.constant 0 : index
    %c0_97 = arith.constant 0 : index
    %98 = vector.load %arg13[%c2_95, %c0_96, %c0_97] : memref<4x1x8xf32, #tpu.memory_space<vmem>>, vector<1x1x8xf32>
    %99 = vector.shape_cast %98 : vector<1x1x8xf32> to vector<1x8xf32>
    %100 = vector.broadcast %99 : vector<1x8xf32> to vector<8x8xf32>
    %101 = arith.addf %97, %100 : vector<8x8xf32>
    %c2_98 = arith.constant 2 : index
    %c0_99 = arith.constant 0 : index
    %c0_100 = arith.constant 0 : index
    %102 = vector.load %arg21[%c2_98, %c0_99, %c0_100] : memref<4x8x8xf32, #tpu.memory_space<vmem>>, vector<1x8x8xf32>
    %103 = vector.shape_cast %102 : vector<1x8x8xf32> to vector<8x8xf32>
    %104 = vector.shape_cast %101 : vector<8x8xf32> to vector<1x8x8xf32>
    tpu.vector_store %arg21[%c2_98, %c0_99, %c0_100], %104 {strides = array<i32>} : memref<4x8x8xf32, #tpu.memory_space<vmem>>, vector<1x8x8xf32>,
    %c3 = arith.constant 3 : index
    %c0_101 = arith.constant 0 : index
    %c0_102 = arith.constant 0 : index
    %105 = vector.load %arg8[%c3, %c0_101, %c0_102] : memref<4x32x8xbf16, #tpu.memory_space<vmem>>, vector<1x32x8xbf16>
    %106 = vector.shape_cast %105 : vector<1x32x8xbf16> to vector<32x8xbf16>
    %cst_103 = arith.constant dense<0.000000e+00> : vector<8x8xf32>
    %107 = tpu.matmul %12, %106, %cst_103 {dimension_numbers = #tpu.dot_dimension_numbers<[1], [0], [0], [1], [0, 0, 1, 1], [], []>} : vector<8x32xbf16>, vector<32x8xbf16>, vector<8x8xf32> -> vector<8x8xf32>
    %c3_104 = arith.constant 3 : index
    %c0_105 = arith.constant 0 : index
    %c0_106 = arith.constant 0 : index
    %108 = vector.load %arg9[%c3_104, %c0_105, %c0_106] : memref<4x1x8xf32, #tpu.memory_space<vmem>>, vector<1x1x8xf32>
    %109 = vector.shape_cast %108 : vector<1x1x8xf32> to vector<1x8xf32>
    %110 = vector.broadcast %109 : vector<1x8xf32> to vector<8x8xf32>
    %111 = arith.addf %107, %110 : vector<8x8xf32>
    %c3_107 = arith.constant 3 : index
    %c0_108 = arith.constant 0 : index
    %c0_109 = arith.constant 0 : index
    %112 = vector.load %arg19[%c3_107, %c0_108, %c0_109] : memref<4x8x8xf32, #tpu.memory_space<vmem>>, vector<1x8x8xf32>
    %113 = vector.shape_cast %112 : vector<1x8x8xf32> to vector<8x8xf32>
    %114 = vector.shape_cast %111 : vector<8x8xf32> to vector<1x8x8xf32>
    tpu.vector_store %arg19[%c3_107, %c0_108, %c0_109], %114 {strides = array<i32>} : memref<4x8x8xf32, #tpu.memory_space<vmem>>, vector<1x8x8xf32>,
    %c3_110 = arith.constant 3 : index
    %c0_111 = arith.constant 0 : index
    %c0_112 = arith.constant 0 : index
    %115 = vector.load %arg10[%c3_110, %c0_111, %c0_112] : memref<4x32x8xbf16, #tpu.memory_space<vmem>>, vector<1x32x8xbf16>
    %116 = vector.shape_cast %115 : vector<1x32x8xbf16> to vector<32x8xbf16>
    %cst_113 = arith.constant dense<0.000000e+00> : vector<8x8xf32>
    %117 = tpu.matmul %13, %116, %cst_113 {dimension_numbers = #tpu.dot_dimension_numbers<[1], [0], [0], [1], [0, 0, 1, 1], [], []>} : vector<8x32xbf16>, vector<32x8xbf16>, vector<8x8xf32> -> vector<8x8xf32>
    %c3_114 = arith.constant 3 : index
    %c0_115 = arith.constant 0 : index
    %c0_116 = arith.constant 0 : index
    %118 = vector.load %arg11[%c3_114, %c0_115, %c0_116] : memref<4x1x8xf32, #tpu.memory_space<vmem>>, vector<1x1x8xf32>
    %119 = vector.shape_cast %118 : vector<1x1x8xf32> to vector<1x8xf32>
    %120 = vector.broadcast %119 : vector<1x8xf32> to vector<8x8xf32>
    %121 = arith.addf %117, %120 : vector<8x8xf32>
    %c3_117 = arith.constant 3 : index
    %c0_118 = arith.constant 0 : index
    %c0_119 = arith.constant 0 : index
    %122 = vector.load %arg20[%c3_117, %c0_118, %c0_119] : memref<4x8x8xf32, #tpu.memory_space<vmem>>, vector<1x8x8xf32>
    %123 = vector.shape_cast %122 : vector<1x8x8xf32> to vector<8x8xf32>
    %124 = vector.shape_cast %121 : vector<8x8xf32> to vector<1x8x8xf32>
    tpu.vector_store %arg20[%c3_117, %c0_118, %c0_119], %124 {strides = array<i32>} : memref<4x8x8xf32, #tpu.memory_space<vmem>>, vector<1x8x8xf32>,
    %c3_120 = arith.constant 3 : index
    %c0_121 = arith.constant 0 : index
    %c0_122 = arith.constant 0 : index
    %125 = vector.load %arg12[%c3_120, %c0_121, %c0_122] : memref<4x32x8xbf16, #tpu.memory_space<vmem>>, vector<1x32x8xbf16>
    %126 = vector.shape_cast %125 : vector<1x32x8xbf16> to vector<32x8xbf16>
    %cst_123 = arith.constant dense<0.000000e+00> : vector<8x8xf32>
    %127 = tpu.matmul %14, %126, %cst_123 {dimension_numbers = #tpu.dot_dimension_numbers<[1], [0], [0], [1], [0, 0, 1, 1], [], []>} : vector<8x32xbf16>, vector<32x8xbf16>, vector<8x8xf32> -> vector<8x8xf32>
    %c3_124 = arith.constant 3 : index
    %c0_125 = arith.constant 0 : index
    %c0_126 = arith.constant 0 : index
    %128 = vector.load %arg13[%c3_124, %c0_125, %c0_126] : memref<4x1x8xf32, #tpu.memory_space<vmem>>, vector<1x1x8xf32>
    %129 = vector.shape_cast %128 : vector<1x1x8xf32> to vector<1x8xf32>
    %130 = vector.broadcast %129 : vector<1x8xf32> to vector<8x8xf32>
    %131 = arith.addf %127, %130 : vector<8x8xf32>
    %c3_127 = arith.constant 3 : index
    %c0_128 = arith.constant 0 : index
    %c0_129 = arith.constant 0 : index
    %132 = vector.load %arg21[%c3_127, %c0_128, %c0_129] : memref<4x8x8xf32, #tpu.memory_space<vmem>>, vector<1x8x8xf32>
    %133 = vector.shape_cast %132 : vector<1x8x8xf32> to vector<8x8xf32>
    %134 = vector.shape_cast %131 : vector<8x8xf32> to vector<1x8x8xf32>
    tpu.vector_store %arg21[%c3_127, %c0_128, %c0_129], %134 {strides = array<i32>} : memref<4x8x8xf32, #tpu.memory_space<vmem>>, vector<1x8x8xf32>,
    %c0_130 = arith.constant 0 : index
    %c0_131 = arith.constant 0 : index
    %c0_132 = arith.constant 0 : index
    %135 = vector.load %arg19[%c0_130, %c0_131, %c0_132] : memref<4x8x8xf32, #tpu.memory_space<vmem>>, vector<4x8x8xf32>
    %136 = arith.truncf %135 : vector<4x8x8xf32> to vector<4x8x8xbf16>
    %c0_133 = arith.constant 0 : index
    %c0_134 = arith.constant 0 : index
    %c0_135 = arith.constant 0 : index
    %137 = vector.load %arg20[%c0_133, %c0_134, %c0_135] : memref<4x8x8xf32, #tpu.memory_space<vmem>>, vector<4x8x8xf32>
    %138 = arith.truncf %137 : vector<4x8x8xf32> to vector<4x8x8xbf16>
    %c0_136 = arith.constant 0 : index
    %c0_137 = arith.constant 0 : index
    %c0_138 = arith.constant 0 : index
    %139 = vector.load %arg21[%c0_136, %c0_137, %c0_138] : memref<4x8x8xf32, #tpu.memory_space<vmem>>, vector<4x8x8xf32>
    %140 = arith.truncf %139 : vector<4x8x8xf32> to vector<4x8x8xbf16>
    "tpu.trace_start"() <{level = 10 : i32, message = "hqd,hkd->hqk"}> : () -> ()
    %cst_139 = arith.constant dense<0.000000e+00> : vector<4x8x8xf32>
    %141 = tpu.matmul %136, %138, %cst_139 {dimension_numbers = #tpu.dot_dimension_numbers<[2], [2], [1], [1], [0, 0, 0, 1, 1, 1], [0], [0]>} : vector<4x8x8xbf16>, vector<4x8x8xbf16>, vector<4x8x8xf32> -> vector<4x8x8xf32>
    "tpu.trace_stop"() : () -> ()
    %cst_140 = arith.constant dense<0xFF800000> : vector<4x8xf32>
    %142 = vector.multi_reduction <maximumf>, %141, %cst_140 [2] : vector<4x8x8xf32> to vector<4x8xf32>
    %143 = vector.shape_cast %142 : vector<4x8xf32> to vector<4x8x1xf32>
    %144 = vector.broadcast %143 : vector<4x8x1xf32> to vector<4x8x8xf32>
    %145 = arith.subf %141, %144 : vector<4x8x8xf32>
    %146 = math.exp %145 : vector<4x8x8xf32>
    %cst_141 = arith.constant dense<0.000000e+00> : vector<4x8xf32>
    %147 = vector.multi_reduction <add>, %146, %cst_141 [2] : vector<4x8x8xf32> to vector<4x8xf32>
    %148 = vector.shape_cast %147 : vector<4x8xf32> to vector<4x8x1xf32>
    %149 = arith.truncf %146 : vector<4x8x8xf32> to vector<4x8x8xbf16>
    "tpu.trace_start"() <{level = 10 : i32, message = "hqk,hkd->hqd"}> : () -> ()
    %cst_142 = arith.constant dense<0.000000e+00> : vector<4x8x8xf32>
    %150 = tpu.matmul %149, %140, %cst_142 {dimension_numbers = #tpu.dot_dimension_numbers<[2], [1], [1], [2], [0, 0, 0, 1, 1, 2], [0], [0]>} : vector<4x8x8xbf16>, vector<4x8x8xbf16>, vector<4x8x8xf32> -> vector<4x8x8xf32>
    "tpu.trace_stop"() : () -> ()
    %151 = tpu.reciprocal %148 {approx = true} : vector<4x8x1xf32> -> vector<4x8x1xf32>
    %152 = vector.broadcast %151 : vector<4x8x1xf32> to vector<4x8x8xf32>
    %153 = arith.mulf %150, %152 : vector<4x8x8xf32>
    %154 = arith.truncf %153 : vector<4x8x8xf32> to vector<4x8x8xbf16>
    %155 = vector.extract_strided_slice %154 {offsets = [0, 0, 0], sizes = [1, 8, 8], strides = [1, 1, 1]} : vector<4x8x8xbf16> to vector<1x8x8xbf16>
    %156 = vector.shape_cast %155 : vector<1x8x8xbf16> to vector<8x8xbf16>
    %c0_143 = arith.constant 0 : index
    %c0_144 = arith.constant 0 : index
    %157 = vector.load %arg22[%c0_143, %c0_144] : memref<8x32xbf16, #tpu.memory_space<vmem>>, vector<8x8xbf16>
    tpu.vector_store %arg22[%c0_143, %c0_144], %156 {strides = array<i32>} : memref<8x32xbf16, #tpu.memory_space<vmem>>, vector<8x8xbf16>,
    %158 = vector.extract_strided_slice %154 {offsets = [1, 0, 0], sizes = [1, 8, 8], strides = [1, 1, 1]} : vector<4x8x8xbf16> to vector<1x8x8xbf16>
    %159 = vector.shape_cast %158 : vector<1x8x8xbf16> to vector<8x8xbf16>
    %c0_145 = arith.constant 0 : index
    %c8 = arith.constant 8 : index
    %160 = vector.load %arg22[%c0_145, %c8] : memref<8x32xbf16, #tpu.memory_space<vmem>>, vector<8x8xbf16>
    tpu.vector_store %arg22[%c0_145, %c8], %159 {strides = array<i32>} : memref<8x32xbf16, #tpu.memory_space<vmem>>, vector<8x8xbf16>,
    %161 = vector.extract_strided_slice %154 {offsets = [2, 0, 0], sizes = [1, 8, 8], strides = [1, 1, 1]} : vector<4x8x8xbf16> to vector<1x8x8xbf16>
    %162 = vector.shape_cast %161 : vector<1x8x8xbf16> to vector<8x8xbf16>
    %c0_146 = arith.constant 0 : index
    %c16 = arith.constant 16 : index
    %163 = vector.load %arg22[%c0_146, %c16] : memref<8x32xbf16, #tpu.memory_space<vmem>>, vector<8x8xbf16>
    tpu.vector_store %arg22[%c0_146, %c16], %162 {strides = array<i32>} : memref<8x32xbf16, #tpu.memory_space<vmem>>, vector<8x8xbf16>,
    %164 = vector.extract_strided_slice %154 {offsets = [3, 0, 0], sizes = [1, 8, 8], strides = [1, 1, 1]} : vector<4x8x8xbf16> to vector<1x8x8xbf16>
    %165 = vector.shape_cast %164 : vector<1x8x8xbf16> to vector<8x8xbf16>
    %c0_147 = arith.constant 0 : index
    %c24 = arith.constant 24 : index
    %166 = vector.load %arg22[%c0_147, %c24] : memref<8x32xbf16, #tpu.memory_space<vmem>>, vector<8x8xbf16>
    tpu.vector_store %arg22[%c0_147, %c24], %165 {strides = array<i32>} : memref<8x32xbf16, #tpu.memory_space<vmem>>, vector<8x8xbf16>,
    %c0_148 = arith.constant 0 : index
    %c0_149 = arith.constant 0 : index
    %167 = vector.load %arg22[%c0_148, %c0_149] : memref<8x32xbf16, #tpu.memory_space<vmem>>, vector<8x32xbf16>
    %c0_150 = arith.constant 0 : index
    %c0_151 = arith.constant 0 : index
    %168 = vector.load %arg14[%c0_150, %c0_151] : memref<32x32xbf16, #tpu.memory_space<vmem>>, vector<32x32xbf16>
    %cst_152 = arith.constant dense<0.000000e+00> : vector<8x32xf32>
    %169 = tpu.matmul %167, %168, %cst_152 {dimension_numbers = #tpu.dot_dimension_numbers<[1], [0], [0], [1], [0, 0, 1, 1], [], []>} : vector<8x32xbf16>, vector<32x32xbf16>, vector<8x32xf32> -> vector<8x32xf32>
    %c0_153 = arith.constant 0 : index
    %c0_154 = arith.constant 0 : index
    %170 = vector.load %arg15[%c0_153, %c0_154] : memref<1x32xf32, #tpu.memory_space<vmem>>, vector<1x32xf32>
    %171 = vector.broadcast %170 : vector<1x32xf32> to vector<8x32xf32>
    %172 = arith.addf %169, %171 : vector<8x32xf32>
    %c0_155 = arith.constant 0 : index
    %c0_156 = arith.constant 0 : index
    %c0_157 = arith.constant 0 : index
    %173 = vector.load %arg7[%c0_155, %c0_156, %c0_157] : memref<1x8x32xf32, #tpu.memory_space<vmem>>, vector<1x8x32xf32>
    %174 = vector.shape_cast %173 : vector<1x8x32xf32> to vector<8x32xf32>
    %175 = arith.addf %174, %172 : vector<8x32xf32>
    %cst_158 = arith.constant dense<0.000000e+00> : vector<8xf32>
    %176 = vector.multi_reduction <add>, %175, %cst_158 [1] : vector<8x32xf32> to vector<8xf32>
    %177 = vector.shape_cast %176 : vector<8xf32> to vector<8x1xf32>
    %cst_159 = arith.constant 3.200000e+01 : f32
    %178 = vector.broadcast %cst_159 : f32 to vector<8x1xf32>
    %179 = arith.divf %177, %178 : vector<8x1xf32>
    %180 = vector.broadcast %179 : vector<8x1xf32> to vector<8x32xf32>
    %181 = arith.subf %175, %180 : vector<8x32xf32>
    %182 = arith.mulf %181, %181 : vector<8x32xf32>
    %cst_160 = arith.constant dense<0.000000e+00> : vector<8xf32>
    %183 = vector.multi_reduction <add>, %182, %cst_160 [1] : vector<8x32xf32> to vector<8xf32>
    %184 = vector.shape_cast %183 : vector<8xf32> to vector<8x1xf32>
    %cst_161 = arith.constant 3.200000e+01 : f32
    %185 = vector.broadcast %cst_161 : f32 to vector<8x1xf32>
    %186 = arith.divf %184, %185 : vector<8x1xf32>
    %cst_162 = arith.constant 9.99999974E-6 : f32
    %187 = vector.broadcast %cst_162 : f32 to vector<8x1xf32>
    %188 = arith.addf %186, %187 : vector<8x1xf32>
    %189 = math.rsqrt %188 : vector<8x1xf32>
    %190 = vector.broadcast %189 : vector<8x1xf32> to vector<8x32xf32>
    %191 = arith.mulf %181, %190 : vector<8x32xf32>
    %c0_163 = arith.constant 0 : index
    %c0_164 = arith.constant 0 : index
    %192 = vector.load %arg16[%c0_163, %c0_164] : memref<1x32xf32, #tpu.memory_space<vmem>>, vector<1x32xf32>
    %193 = vector.broadcast %192 : vector<1x32xf32> to vector<8x32xf32>
    %194 = arith.mulf %191, %193 : vector<8x32xf32>
    %c0_165 = arith.constant 0 : index
    %c0_166 = arith.constant 0 : index
    %195 = vector.load %arg17[%c0_165, %c0_166] : memref<1x32xf32, #tpu.memory_space<vmem>>, vector<1x32xf32>
    %196 = vector.broadcast %195 : vector<1x32xf32> to vector<8x32xf32>
    %197 = arith.addf %194, %196 : vector<8x32xf32>
    %c0_167 = arith.constant 0 : index
    %c0_168 = arith.constant 0 : index
    %c0_169 = arith.constant 0 : index
    %198 = vector.load %arg18[%c0_167, %c0_168, %c0_169] : memref<1x8x32xf32, #tpu.memory_space<vmem>>, vector<1x8x32xf32>
    %199 = vector.shape_cast %198 : vector<1x8x32xf32> to vector<8x32xf32>
    %200 = vector.shape_cast %197 : vector<8x32xf32> to vector<1x8x32xf32>
    tpu.vector_store %arg18[%c0_167, %c0_168, %c0_169], %200 {strides = array<i32>} : memref<1x8x32xf32, #tpu.memory_space<vmem>>, vector<1x8x32xf32>,
    return
  }
  func.func @transform_0(%arg0: i32, %arg1: i32) -> (i32, i32, i32) {
    %c0_i32 = arith.constant 0 : i32
    %c0_i32_0 = arith.constant 0 : i32
    return %arg0, %arg1, %c0_i32 : i32, i32, i32
  }
  func.func @transform_1(%arg0: i32, %arg1: i32) -> (i32, i32, i32) {
    %c0_i32 = arith.constant 0 : i32
    %c0_i32_0 = arith.constant 0 : i32
    return %arg0, %arg1, %c0_i32 : i32, i32, i32
  }
  func.func @transform_2(%arg0: i32, %arg1: i32) -> (i32, i32, i32) {
    %c0_i32 = arith.constant 0 : i32
    %c0_i32_0 = arith.constant 0 : i32
    %c0_i32_1 = arith.constant 0 : i32
    return %arg0, %c0_i32, %c0_i32_0 : i32, i32, i32
  }
  func.func @transform_3(%arg0: i32, %arg1: i32) -> (i32, i32, i32) {
    %c0_i32 = arith.constant 0 : i32
    %c0_i32_0 = arith.constant 0 : i32
    %c0_i32_1 = arith.constant 0 : i32
    return %arg0, %c0_i32, %c0_i32_0 : i32, i32, i32
  }
  func.func @transform_4(%arg0: i32, %arg1: i32) -> (i32, i32, i32) {
    %c0_i32 = arith.constant 0 : i32
    %c0_i32_0 = arith.constant 0 : i32
    %c0_i32_1 = arith.constant 0 : i32
    return %arg0, %c0_i32, %c0_i32_0 : i32, i32, i32
  }
  func.func @transform_5(%arg0: i32, %arg1: i32) -> (i32, i32, i32) {
    %c0_i32 = arith.constant 0 : i32
    %c0_i32_0 = arith.constant 0 : i32
    return %arg0, %arg1, %c0_i32 : i32, i32, i32
  }
  func.func @transform_6(%arg0: i32, %arg1: i32) -> (i32, i32, i32) {
    %c0_i32 = arith.constant 0 : i32
    %c0_i32_0 = arith.constant 0 : i32
    %c0_i32_1 = arith.constant 0 : i32
    %c0_i32_2 = arith.constant 0 : i32
    return %c0_i32, %c0_i32_0, %c0_i32_1 : i32, i32, i32
  }
  func.func @transform_7(%arg0: i32, %arg1: i32) -> (i32, i32, i32) {
    %c0_i32 = arith.constant 0 : i32
    %c0_i32_0 = arith.constant 0 : i32
    %c0_i32_1 = arith.constant 0 : i32
    %c0_i32_2 = arith.constant 0 : i32
    return %c0_i32, %c0_i32_0, %c0_i32_1 : i32, i32, i32
  }
  func.func @transform_8(%arg0: i32, %arg1: i32) -> (i32, i32, i32) {
    %c0_i32 = arith.constant 0 : i32
    %c0_i32_0 = arith.constant 0 : i32
    %c0_i32_1 = arith.constant 0 : i32
    %c0_i32_2 = arith.constant 0 : i32
    return %c0_i32, %c0_i32_0, %c0_i32_1 : i32, i32, i32
  }
  func.func @transform_9(%arg0: i32, %arg1: i32) -> (i32, i32, i32) {
    %c0_i32 = arith.constant 0 : i32
    %c0_i32_0 = arith.constant 0 : i32
    %c0_i32_1 = arith.constant 0 : i32
    %c0_i32_2 = arith.constant 0 : i32
    return %c0_i32, %c0_i32_0, %c0_i32_1 : i32, i32, i32
  }
  func.func @transform_10(%arg0: i32, %arg1: i32) -> (i32, i32, i32) {
    %c0_i32 = arith.constant 0 : i32
    %c0_i32_0 = arith.constant 0 : i32
    %c0_i32_1 = arith.constant 0 : i32
    %c0_i32_2 = arith.constant 0 : i32
    return %c0_i32, %c0_i32_0, %c0_i32_1 : i32, i32, i32
  }
  func.func @transform_11(%arg0: i32, %arg1: i32) -> (i32, i32, i32) {
    %c0_i32 = arith.constant 0 : i32
    %c0_i32_0 = arith.constant 0 : i32
    %c0_i32_1 = arith.constant 0 : i32
    %c0_i32_2 = arith.constant 0 : i32
    return %c0_i32, %c0_i32_0, %c0_i32_1 : i32, i32, i32
  }
  func.func @transform_12(%arg0: i32, %arg1: i32) -> (i32, i32) {
    %c0_i32 = arith.constant 0 : i32
    %c0_i32_0 = arith.constant 0 : i32
    %c0_i32_1 = arith.constant 0 : i32
    return %c0_i32, %c0_i32_0 : i32, i32
  }
  func.func @transform_13(%arg0: i32, %arg1: i32) -> (i32, i32) {
    %c0_i32 = arith.constant 0 : i32
    %c0_i32_0 = arith.constant 0 : i32
    %c0_i32_1 = arith.constant 0 : i32
    return %c0_i32, %c0_i32_0 : i32, i32
  }
  func.func @transform_14(%arg0: i32, %arg1: i32) -> (i32, i32) {
    %c0_i32 = arith.constant 0 : i32
    %c0_i32_0 = arith.constant 0 : i32
    %c0_i32_1 = arith.constant 0 : i32
    return %c0_i32, %c0_i32_0 : i32, i32
  }
  func.func @transform_15(%arg0: i32, %arg1: i32) -> (i32, i32) {
    %c0_i32 = arith.constant 0 : i32
    %c0_i32_0 = arith.constant 0 : i32
    %c0_i32_1 = arith.constant 0 : i32
    return %c0_i32, %c0_i32_0 : i32, i32
  }
  func.func @transform_16(%arg0: i32, %arg1: i32) -> (i32, i32, i32) {
    %c0_i32 = arith.constant 0 : i32
    %c0_i32_0 = arith.constant 0 : i32
    return %arg0, %arg1, %c0_i32 : i32, i32, i32
  }
}

</mosaic_0001>

<llo_original>
// kernel: tpu_custom_call.1
$region0: #{tpu_custom_call.1}
  #allocation0 [shape = 'u32[]', space=smem, size = 0x4, offset = 0x4, fixed_abs, tag = 'smem constant byte address 0x4 - core index']
  #allocation1 [shape = 'u32[144,128]{1,0:T(1,128)}', space=vmem, size = 0x12000, scoped, tag = 'internal scratch']
  #allocation2 [shape = 'f32[4,8,8]{2,1,0:T(8,128)}', space=vmem, size = 0x4000, scoped, tag = 'scratch operand']
  #allocation3 [shape = 'f32[4,8,8]{2,1,0:T(8,128)}', space=vmem, size = 0x4000, scoped, tag = 'scratch operand']
  #allocation4 [shape = 'f32[4,8,8]{2,1,0:T(8,128)}', space=vmem, size = 0x4000, scoped, tag = 'scratch operand']
  #allocation5 [shape = 'bf16[8,32]{1,0:T(8,128)(2,1)}', space=vmem, size = 0x800, scoped, tag = 'scratch operand']
  %s0 = inlined_call_operand.vmem [shape: f32[2,8,32], index: 0, kind: input, shape index: {}]
  %s1 = inlined_call_operand.vmem [shape: f32[2,8,32], index: 1, kind: input, shape index: {}]
  %s2 = inlined_call_operand.vmem [shape: f32[2,8,32], index: 2, kind: input, shape index: {}]
  %s3 = inlined_call_operand.vmem [shape: f32[2,8,32], index: 3, kind: input, shape index: {}]
  %s4 = inlined_call_operand.vmem [shape: f32[2,8,32], index: 4, kind: input, shape index: {}]
  %s5 = inlined_call_operand.vmem [shape: f32[2,8,32], index: 5, kind: input, shape index: {}]
  %s6 = inlined_call_operand.vmem [shape: bf16[4,32,8], index: 6, kind: input, shape index: {}]
  %s7 = inlined_call_operand.vmem [shape: f32[4,1,8], index: 7, kind: input, shape index: {}]
  %s8 = inlined_call_operand.vmem [shape: bf16[4,32,8], index: 8, kind: input, shape index: {}]
  %s9 = inlined_call_operand.vmem [shape: f32[4,1,8], index: 9, kind: input, shape index: {}]
  %s10 = inlined_call_operand.vmem [shape: bf16[4,32,8], index: 10, kind: input, shape index: {}]
  %s11 = inlined_call_operand.vmem [shape: f32[4,1,8], index: 11, kind: input, shape index: {}]
  %s12 = inlined_call_operand.vmem [shape: bf16[32,32], index: 12, kind: input, shape index: {}]
  %s13 = inlined_call_operand.vmem [shape: f32[1,32], index: 13, kind: input, shape index: {}]
  %s14 = inlined_call_operand.vmem [shape: f32[1,32], index: 14, kind: input, shape index: {}]
  %s15 = inlined_call_operand.vmem [shape: f32[1,32], index: 15, kind: input, shape index: {}]
  %s16 = inlined_call_operand.hbm [shape: f32[2,8,32], index: 16, kind: output, shape index: {}]
  %s17 = sld [smem:[#allocation0]]
  $region97: #{tpu_custom_call.1} parent=0
    _
  %s19 = ssub.s32 1, %s17
  %s20 = scalar_select 0, %s19, %s17
  $region1: #{tpu_custom_call.1} parent=0
    #allocation6 [shape = 'u8[8192]{0}', space=vmem, size = 0x2000, scoped, tag = 'output window, operand 0']
    #allocation7 [shape = 's32[2]{0}', space=sflag, size = 0x8, scoped, tag = 'scoped memory for tpu_custom_call.1']
    %21 = vsyncpa [#allocation7], 0
    %s22 = scalar_lea.sflag [#allocation7], 1
    %23 = vsyncpa %s22, 0
    loop: start=0, step=1, limit=4
    $region2: #{tpu_custom_call.1} parent=1 // loop_pre_header
      _
    $region3: #{tpu_custom_call.1} parent=1 // loop_header
      %s25 = sphi 0, %s29
      %p26 = scmp.ge.s32.totalorder %s25, 4
      %s32 = sphi 0, %s44
      %s33 = sphi 0, %s40
      %s34 = sphi 0, %s32
      %s35 = sphi 0, %s33
      %s36 = sphi 0, %s34
      %s37 = sphi 0, %s35
      %s49 = sphi 0, %s51
      %s52 = sphi 0, %s49
      %s53 = sphi 0, %s52
      %s69 = sphi 0, %s53
      %s77 = sphi 0, %s79
      %s80 = sphi 0, %s77
      %s81 = sphi 0, %s80
      %s97 = sphi 0, %s81
      %s103 = sphi 0, %s105
      %s106 = sphi 0, %s103
      %s107 = sphi 0, %s106
      %s123 = sphi 0, %s107
      %s129 = sphi 0, %s131
      %s132 = sphi 0, %s129
      %s133 = sphi 0, %s132
      %s149 = sphi 0, %s133
      %s155 = sphi 0, %s157
      %s158 = sphi 0, %s155
      %s159 = sphi 0, %s158
      %s175 = sphi 0, %s159
      %s183 = sphi 0, %s185
      %s186 = sphi 0, %s183
      %s187 = sphi 0, %s186
      %s203 = sphi 0, %s187
      %s207 = sphi 0, %s207
      %s209 = sphi 0, %s207
      %s210 = sphi 0, %s209
      %s224 = sphi 0, %s210
      %s228 = sphi 0, %s228
      %s230 = sphi 0, %s228
      %s231 = sphi 0, %s230
      %s245 = sphi 0, %s231
      %s249 = sphi 0, %s249
      %s251 = sphi 0, %s249
      %s252 = sphi 0, %s251
      %s266 = sphi 0, %s252
      %s270 = sphi 0, %s270
      %s272 = sphi 0, %s270
      %s273 = sphi 0, %s272
      %s287 = sphi 0, %s273
      %s291 = sphi 0, %s291
      %s293 = sphi 0, %s291
      %s294 = sphi 0, %s293
      %s308 = sphi 0, %s294
      %s312 = sphi 0, %s312
      %s314 = sphi 0, %s312
      %s315 = sphi 0, %s314
      %s329 = sphi 0, %s315
      %s333 = sphi 0, %s333
      %s335 = sphi 0, %s333
      %s336 = sphi 0, %s335
      %s350 = sphi 0, %s336
      %s354 = sphi 0, %s354
      %s356 = sphi 0, %s354
      %s357 = sphi 0, %s356
      %s371 = sphi 0, %s357
      %s375 = sphi 0, %s375
      %s377 = sphi 0, %s375
      %s378 = sphi 0, %s377
      %s392 = sphi 0, %s378
      %s396 = sphi 0, %s396
      %s398 = sphi 0, %s396
      %s399 = sphi 0, %s398
      %s413 = sphi 0, %s399
      %s421 = sphi 0, %s423
      %s424 = sphi 0, %s421
      %s425 = sphi 0, %s424
      %s441 = sphi 0, %s425
    $region4: #{tpu_custom_call.1} parent=1 // loop_header_branch
      %28 = sbr.rel (%p26) target = $region8
    $region5: #{tpu_custom_call.1} parent=1 // loop_body
      %s30 = ssub.s32 %s25, 1
      %s31 = ssub.s32 %s25, 2
      %s38 = sadd.s32 1, %s33
      %p39 = scmp.ge.s32.totalorder %s38, 1
      %s40 = scalar_select %p39, 0, %s38
      %s41 = sadd.s32 1, %s32
      %s42 = scalar_select %p39, %s41, %s32
      %p43 = scmp.ge.s32.totalorder %s42, 2
      %s44 = scalar_select %p43, 0, %s42
      %s45 = ssub.s32 %s32, %s44
      %s46 = ssub.s32 %s33, %s40
      %s47 = sor.u32 %s45, %s46
      %p48 = scmp.eq.s32.totalorder %s47, 0
      %s50 = sadd.s32 %s49, 1
      %s51 = scalar_select %p48, %s49, %s50
      %p54 = pneg %p48
      %p55 = scmp.eq.s32.totalorder %s25, 1
      %p56 = por %p54, %p55
      %p57 = scmp.ne.s32.totalorder %s49, %s52
      %p58 = scmp.eq.s32.totalorder %s25, 0
      %p59 = por %p57, %p58
      %p60 = scmp.ne.s32.totalorder %s49, %s52
      %p61 = scmp.eq.s32.totalorder %s30, 1
      %p62 = por %p60, %p61
      %p63 = scmp.ne.s32.totalorder %s52, %s53
      %p64 = scmp.eq.s32.totalorder %s30, 0
      %p65 = por %p63, %p64
      %p66 = scmp.ne.s32.totalorder %s52, %s53
      %p67 = scmp.eq.s32.totalorder %s31, 1
      %p68 = por %p66, %p67
      %p70 = scmp.ne.s32.totalorder %s53, %s69
      %p71 = scmp.eq.s32.totalorder %s31, 0
      %p72 = por %p70, %p71
      %s73 = ssub.s32 %s32, %s44
      %s74 = ssub.s32 %s33, %s40
      %s75 = sor.u32 %s73, %s74
      %p76 = scmp.eq.s32.totalorder %s75, 0
      %s78 = sadd.s32 %s77, 1
      %s79 = scalar_select %p76, %s77, %s78
      %p82 = pneg %p76
      %p83 = scmp.eq.s32.totalorder %s25, 1
      %p84 = por %p82, %p83
      %p85 = scmp.ne.s32.totalorder %s77, %s80
      %p86 = scmp.eq.s32.totalorder %s25, 0
      %p87 = por %p85, %p86
      %p88 = scmp.ne.s32.totalorder %s77, %s80
      %p89 = scmp.eq.s32.totalorder %s30, 1
      %p90 = por %p88, %p89
      %p91 = scmp.ne.s32.totalorder %s80, %s81
      %p92 = scmp.eq.s32.totalorder %s30, 0
      %p93 = por %p91, %p92
      %p94 = scmp.ne.s32.totalorder %s80, %s81
      %p95 = scmp.eq.s32.totalorder %s31, 1
      %p96 = por %p94, %p95
      %p98 = scmp.ne.s32.totalorder %s81, %s97
      %p99 = scmp.eq.s32.totalorder %s31, 0
      %p100 = por %p98, %p99
      %s101 = ssub.s32 %s32, %s44
      %p102 = scmp.eq.s32.totalorder %s101, 0
      %s104 = sadd.s32 %s103, 1
      %s105 = scalar_select %p102, %s103, %s104
      %p108 = pneg %p102
      %p109 = scmp.eq.s32.totalorder %s25, 1
      %p110 = por %p108, %p109
      %p111 = scmp.ne.s32.totalorder %s103, %s106
      %p112 = scmp.eq.s32.totalorder %s25, 0
      %p113 = por %p111, %p112
      %p114 = scmp.ne.s32.totalorder %s103, %s106
      %p115 = scmp.eq.s32.totalorder %s30, 1
      %p116 = por %p114, %p115
      %p117 = scmp.ne.s32.totalorder %s106, %s107
      %p118 = scmp.eq.s32.totalorder %s30, 0
      %p119 = por %p117, %p118
      %p120 = scmp.ne.s32.totalorder %s106, %s107
      %p121 = scmp.eq.s32.totalorder %s31, 1
      %p122 = por %p120, %p121
      %p124 = scmp.ne.s32.totalorder %s107, %s123
      %p125 = scmp.eq.s32.totalorder %s31, 0
      %p126 = por %p124, %p125
      %s127 = ssub.s32 %s32, %s44
      %p128 = scmp.eq.s32.totalorder %s127, 0
      %s130 = sadd.s32 %s129, 1
      %s131 = scalar_select %p128, %s129, %s130
      %p134 = pneg %p128
      %p135 = scmp.eq.s32.totalorder %s25, 1
      %p136 = por %p134, %p135
      %p137 = scmp.ne.s32.totalorder %s129, %s132
      %p138 = scmp.eq.s32.totalorder %s25, 0
      %p139 = por %p137, %p138
      %p140 = scmp.ne.s32.totalorder %s129, %s132
      %p141 = scmp.eq.s32.totalorder %s30, 1
      %p142 = por %p140, %p141
      %p143 = scmp.ne.s32.totalorder %s132, %s133
      %p144 = scmp.eq.s32.totalorder %s30, 0
      %p145 = por %p143, %p144
      %p146 = scmp.ne.s32.totalorder %s132, %s133
      %p147 = scmp.eq.s32.totalorder %s31, 1
      %p148 = por %p146, %p147
      %p150 = scmp.ne.s32.totalorder %s133, %s149
      %p151 = scmp.eq.s32.totalorder %s31, 0
      %p152 = por %p150, %p151
      %s153 = ssub.s32 %s32, %s44
      %p154 = scmp.eq.s32.totalorder %s153, 0
      %s156 = sadd.s32 %s155, 1
      %s157 = scalar_select %p154, %s155, %s156
      %p160 = pneg %p154
      %p161 = scmp.eq.s32.totalorder %s25, 1
      %p162 = por %p160, %p161
      %p163 = scmp.ne.s32.totalorder %s155, %s158
      %p164 = scmp.eq.s32.totalorder %s25, 0
      %p165 = por %p163, %p164
      %p166 = scmp.ne.s32.totalorder %s155, %s158
      %p167 = scmp.eq.s32.totalorder %s30, 1
      %p168 = por %p166, %p167
      %p169 = scmp.ne.s32.totalorder %s158, %s159
      %p170 = scmp.eq.s32.totalorder %s30, 0
      %p171 = por %p169, %p170
      %p172 = scmp.ne.s32.totalorder %s158, %s159
      %p173 = scmp.eq.s32.totalorder %s31, 1
      %p174 = por %p172, %p173
      %p176 = scmp.ne.s32.totalorder %s159, %s175
      %p177 = scmp.eq.s32.totalorder %s31, 0
      %p178 = por %p176, %p177
      %s179 = ssub.s32 %s32, %s44
      %s180 = ssub.s32 %s33, %s40
      %s181 = sor.u32 %s179, %s180
      %p182 = scmp.eq.s32.totalorder %s181, 0
      %s184 = sadd.s32 %s183, 1
      %s185 = scalar_select %p182, %s183, %s184
      %p188 = pneg %p182
      %p189 = scmp.eq.s32.totalorder %s25, 1
      %p190 = por %p188, %p189
      %p191 = scmp.ne.s32.totalorder %s183, %s186
      %p192 = scmp.eq.s32.totalorder %s25, 0
      %p193 = por %p191, %p192
      %p194 = scmp.ne.s32.totalorder %s183, %s186
      %p195 = scmp.eq.s32.totalorder %s30, 1
      %p196 = por %p194, %p195
      %p197 = scmp.ne.s32.totalorder %s186, %s187
      %p198 = scmp.eq.s32.totalorder %s30, 0
      %p199 = por %p197, %p198
      %p200 = scmp.ne.s32.totalorder %s186, %s187
      %p201 = scmp.eq.s32.totalorder %s31, 1
      %p202 = por %p200, %p201
      %p204 = scmp.ne.s32.totalorder %s187, %s203
      %p205 = scmp.eq.s32.totalorder %s31, 0
      %p206 = por %p204, %p205
      %s208 = sadd.s32 %s207, 1
      %p211 = scmp.eq.s32.totalorder %s25, 1
      %p212 = scmp.ne.s32.totalorder %s207, %s209
      %p213 = scmp.eq.s32.totalorder %s25, 0
      %p214 = por %p212, %p213
      %p215 = scmp.ne.s32.totalorder %s207, %s209
      %p216 = scmp.eq.s32.totalorder %s30, 1
      %p217 = por %p215, %p216
      %p218 = scmp.ne.s32.totalorder %s209, %s210
      %p219 = scmp.eq.s32.totalorder %s30, 0
      %p220 = por %p218, %p219
      %p221 = scmp.ne.s32.totalorder %s209, %s210
      %p222 = scmp.eq.s32.totalorder %s31, 1
      %p223 = por %p221, %p222
      %p225 = scmp.ne.s32.totalorder %s210, %s224
      %p226 = scmp.eq.s32.totalorder %s31, 0
      %p227 = por %p225, %p226
      %s229 = sadd.s32 %s228, 1
      %p232 = scmp.eq.s32.totalorder %s25, 1
      %p233 = scmp.ne.s32.totalorder %s228, %s230
      %p234 = scmp.eq.s32.totalorder %s25, 0
      %p235 = por %p233, %p234
      %p236 = scmp.ne.s32.totalorder %s228, %s230
      %p237 = scmp.eq.s32.totalorder %s30, 1
      %p238 = por %p236, %p237
      %p239 = scmp.ne.s32.totalorder %s230, %s231
      %p240 = scmp.eq.s32.totalorder %s30, 0
      %p241 = por %p239, %p240
      %p242 = scmp.ne.s32.totalorder %s230, %s231
      %p243 = scmp.eq.s32.totalorder %s31, 1
      %p244 = por %p242, %p243
      %p246 = scmp.ne.s32.totalorder %s231, %s245
      %p247 = scmp.eq.s32.totalorder %s31, 0
      %p248 = por %p246, %p247
      %s250 = sadd.s32 %s249, 1
      %p253 = scmp.eq.s32.totalorder %s25, 1
      %p254 = scmp.ne.s32.totalorder %s249, %s251
      %p255 = scmp.eq.s32.totalorder %s25, 0
      %p256 = por %p254, %p255
      %p257 = scmp.ne.s32.totalorder %s249, %s251
      %p258 = scmp.eq.s32.totalorder %s30, 1
      %p259 = por %p257, %p258
      %p260 = scmp.ne.s32.totalorder %s251, %s252
      %p261 = scmp.eq.s32.totalorder %s30, 0
      %p262 = por %p260, %p261
      %p263 = scmp.ne.s32.totalorder %s251, %s252
      %p264 = scmp.eq.s32.totalorder %s31, 1
      %p265 = por %p263, %p264
      %p267 = scmp.ne.s32.totalorder %s252, %s266
      %p268 = scmp.eq.s32.totalorder %s31, 0
      %p269 = por %p267, %p268
      %s271 = sadd.s32 %s270, 1
      %p274 = scmp.eq.s32.totalorder %s25, 1
      %p275 = scmp.ne.s32.totalorder %s270, %s272
      %p276 = scmp.eq.s32.totalorder %s25, 0
      %p277 = por %p275, %p276
      %p278 = scmp.ne.s32.totalorder %s270, %s272
      %p279 = scmp.eq.s32.totalorder %s30, 1
      %p280 = por %p278, %p279
      %p281 = scmp.ne.s32.totalorder %s272, %s273
      %p282 = scmp.eq.s32.totalorder %s30, 0
      %p283 = por %p281, %p282
      %p284 = scmp.ne.s32.totalorder %s272, %s273
      %p285 = scmp.eq.s32.totalorder %s31, 1
      %p286 = por %p284, %p285
      %p288 = scmp.ne.s32.totalorder %s273, %s287
      %p289 = scmp.eq.s32.totalorder %s31, 0
      %p290 = por %p288, %p289
      %s292 = sadd.s32 %s291, 1
      %p295 = scmp.eq.s32.totalorder %s25, 1
      %p296 = scmp.ne.s32.totalorder %s291, %s293
      %p297 = scmp.eq.s32.totalorder %s25, 0
      %p298 = por %p296, %p297
      %p299 = scmp.ne.s32.totalorder %s291, %s293
      %p300 = scmp.eq.s32.totalorder %s30, 1
      %p301 = por %p299, %p300
      %p302 = scmp.ne.s32.totalorder %s293, %s294
      %p303 = scmp.eq.s32.totalorder %s30, 0
      %p304 = por %p302, %p303
      %p305 = scmp.ne.s32.totalorder %s293, %s294
      %p306 = scmp.eq.s32.totalorder %s31, 1
      %p307 = por %p305, %p306
      %p309 = scmp.ne.s32.totalorder %s294, %s308
      %p310 = scmp.eq.s32.totalorder %s31, 0
      %p311 = por %p309, %p310
      %s313 = sadd.s32 %s312, 1
      %p316 = scmp.eq.s32.totalorder %s25, 1
      %p317 = scmp.ne.s32.totalorder %s312, %s314
      %p318 = scmp.eq.s32.totalorder %s25, 0
      %p319 = por %p317, %p318
      %p320 = scmp.ne.s32.totalorder %s312, %s314
      %p321 = scmp.eq.s32.totalorder %s30, 1
      %p322 = por %p320, %p321
      %p323 = scmp.ne.s32.totalorder %s314, %s315
      %p324 = scmp.eq.s32.totalorder %s30, 0
      %p325 = por %p323, %p324
      %p326 = scmp.ne.s32.totalorder %s314, %s315
      %p327 = scmp.eq.s32.totalorder %s31, 1
      %p328 = por %p326, %p327
      %p330 = scmp.ne.s32.totalorder %s315, %s329
      %p331 = scmp.eq.s32.totalorder %s31, 0
      %p332 = por %p330, %p331
      %s334 = sadd.s32 %s333, 1
      %p337 = scmp.eq.s32.totalorder %s25, 1
      %p338 = scmp.ne.s32.totalorder %s333, %s335
      %p339 = scmp.eq.s32.totalorder %s25, 0
      %p340 = por %p338, %p339
      %p341 = scmp.ne.s32.totalorder %s333, %s335
      %p342 = scmp.eq.s32.totalorder %s30, 1
      %p343 = por %p341, %p342
      %p344 = scmp.ne.s32.totalorder %s335, %s336
      %p345 = scmp.eq.s32.totalorder %s30, 0
      %p346 = por %p344, %p345
      %p347 = scmp.ne.s32.totalorder %s335, %s336
      %p348 = scmp.eq.s32.totalorder %s31, 1
      %p349 = por %p347, %p348
      %p351 = scmp.ne.s32.totalorder %s336, %s350
      %p352 = scmp.eq.s32.totalorder %s31, 0
      %p353 = por %p351, %p352
      %s355 = sadd.s32 %s354, 1
      %p358 = scmp.eq.s32.totalorder %s25, 1
      %p359 = scmp.ne.s32.totalorder %s354, %s356
      %p360 = scmp.eq.s32.totalorder %s25, 0
      %p361 = por %p359, %p360
      %p362 = scmp.ne.s32.totalorder %s354, %s356
      %p363 = scmp.eq.s32.totalorder %s30, 1
      %p364 = por %p362, %p363
      %p365 = scmp.ne.s32.totalorder %s356, %s357
      %p366 = scmp.eq.s32.totalorder %s30, 0
      %p367 = por %p365, %p366
      %p368 = scmp.ne.s32.totalorder %s356, %s357
      %p369 = scmp.eq.s32.totalorder %s31, 1
      %p370 = por %p368, %p369
      %p372 = scmp.ne.s32.totalorder %s357, %s371
      %p373 = scmp.eq.s32.totalorder %s31, 0
      %p374 = por %p372, %p373
      %s376 = sadd.s32 %s375, 1
      %p379 = scmp.eq.s32.totalorder %s25, 1
      %p380 = scmp.ne.s32.totalorder %s375, %s377
      %p381 = scmp.eq.s32.totalorder %s25, 0
      %p382 = por %p380, %p381
      %p383 = scmp.ne.s32.totalorder %s375, %s377
      %p384 = scmp.eq.s32.totalorder %s30, 1
      %p385 = por %p383, %p384
      %p386 = scmp.ne.s32.totalorder %s377, %s378
      %p387 = scmp.eq.s32.totalorder %s30, 0
      %p388 = por %p386, %p387
      %p389 = scmp.ne.s32.totalorder %s377, %s378
      %p390 = scmp.eq.s32.totalorder %s31, 1
      %p391 = por %p389, %p390
      %p393 = scmp.ne.s32.totalorder %s378, %s392
      %p394 = scmp.eq.s32.totalorder %s31, 0
      %p395 = por %p393, %p394
      %s397 = sadd.s32 %s396, 1
      %p400 = scmp.eq.s32.totalorder %s25, 1
      %p401 = scmp.ne.s32.totalorder %s396, %s398
      %p402 = scmp.eq.s32.totalorder %s25, 0
      %p403 = por %p401, %p402
      %p404 = scmp.ne.s32.totalorder %s396, %s398
      %p405 = scmp.eq.s32.totalorder %s30, 1
      %p406 = por %p404, %p405
      %p407 = scmp.ne.s32.totalorder %s398, %s399
      %p408 = scmp.eq.s32.totalorder %s30, 0
      %p409 = por %p407, %p408
      %p410 = scmp.ne.s32.totalorder %s398, %s399
      %p411 = scmp.eq.s32.totalorder %s31, 1
      %p412 = por %p410, %p411
      %p414 = scmp.ne.s32.totalorder %s399, %s413
      %p415 = scmp.eq.s32.totalorder %s31, 0
      %p416 = por %p414, %p415
      %s417 = ssub.s32 %s32, %s44
      %s418 = ssub.s32 %s33, %s40
      %s419 = sor.u32 %s417, %s418
      %p420 = scmp.eq.s32.totalorder %s419, 0
      %s422 = sadd.s32 %s421, 1
      %s423 = scalar_select %p420, %s421, %s422
      %p426 = pneg %p420
      %p427 = scmp.eq.s32.totalorder %s25, 1
      %p428 = por %p426, %p427
      %p429 = scmp.ne.s32.totalorder %s421, %s424
      %p430 = scmp.eq.s32.totalorder %s25, 0
      %p431 = por %p429, %p430
      %p432 = scmp.ne.s32.totalorder %s421, %s424
      %p433 = scmp.eq.s32.totalorder %s30, 1
      %p434 = por %p432, %p433
      %p435 = scmp.ne.s32.totalorder %s424, %s425
      %p436 = scmp.eq.s32.totalorder %s30, 0
      %p437 = por %p435, %p436
      %p438 = scmp.ne.s32.totalorder %s424, %s425
      %p439 = scmp.eq.s32.totalorder %s31, 1
      %p440 = por %p438, %p439
      %p442 = scmp.ne.s32.totalorder %s425, %s441
      %p443 = scmp.eq.s32.totalorder %s31, 0
      %p444 = por %p442, %p443
      %p445 = scmp.le.s32.totalorder 1, %s25
      %p446 = scmp.lt.s32.totalorder %s25, 3
      %p447 = pnand %p445, %p446
      %p448 = pneg %p447
      // Predicated region
      $region9: #{tpu_custom_call.1} parent=5 // pred_check
        _
      $region10: #{tpu_custom_call.1} parent=5 // pred_check_branch
        %450 = sbr.rel (%p447) target = $region12
      $region11: #{tpu_custom_call.1} parent=5 // pred_region
        %s451 = ssub.s32 %s25, 1
        // Predicated region
        $region13: #{tpu_custom_call.1} parent=11 // pred_check
          %p452 = pneg %p220
        $region14: #{tpu_custom_call.1} parent=11 // pred_check_branch
          %454 = sbr.rel (%p452) target = $region16
        $region15: #{tpu_custom_call.1} parent=11 // pred_region
          _
        $region16: #{tpu_custom_call.1} parent=11 // pred_fallthru
          _
        // Predicated region
        $region17: #{tpu_custom_call.1} parent=11 // pred_check
          %p455 = pneg %p241
        $region18: #{tpu_custom_call.1} parent=11 // pred_check_branch
          %457 = sbr.rel (%p455) target = $region20
        $region19: #{tpu_custom_call.1} parent=11 // pred_region
          _
        $region20: #{tpu_custom_call.1} parent=11 // pred_fallthru
          _
        // Predicated region
        $region21: #{tpu_custom_call.1} parent=11 // pred_check
          %p458 = pneg %p262
        $region22: #{tpu_custom_call.1} parent=11 // pred_check_branch
          %460 = sbr.rel (%p458) target = $region24
        $region23: #{tpu_custom_call.1} parent=11 // pred_region
          _
        $region24: #{tpu_custom_call.1} parent=11 // pred_fallthru
          _
        // Predicated region
        $region25: #{tpu_custom_call.1} parent=11 // pred_check
          %p461 = pneg %p283
        $region26: #{tpu_custom_call.1} parent=11 // pred_check_branch
          %463 = sbr.rel (%p461) target = $region28
        $region27: #{tpu_custom_call.1} parent=11 // pred_region
          _
        $region28: #{tpu_custom_call.1} parent=11 // pred_fallthru
          _
        // Predicated region
        $region29: #{tpu_custom_call.1} parent=11 // pred_check
          %p464 = pneg %p304
        $region30: #{tpu_custom_call.1} parent=11 // pred_check_branch
          %466 = sbr.rel (%p464) target = $region32
        $region31: #{tpu_custom_call.1} parent=11 // pred_region
          _
        $region32: #{tpu_custom_call.1} parent=11 // pred_fallthru
          _
        // Predicated region
        $region33: #{tpu_custom_call.1} parent=11 // pred_check
          %p467 = pneg %p325
        $region34: #{tpu_custom_call.1} parent=11 // pred_check_branch
          %469 = sbr.rel (%p467) target = $region36
        $region35: #{tpu_custom_call.1} parent=11 // pred_region
          _
        $region36: #{tpu_custom_call.1} parent=11 // pred_fallthru
          _
        // Predicated region
        $region37: #{tpu_custom_call.1} parent=11 // pred_check
          %p470 = pneg %p346
        $region38: #{tpu_custom_call.1} parent=11 // pred_check_branch
          %472 = sbr.rel (%p470) target = $region40
        $region39: #{tpu_custom_call.1} parent=11 // pred_region
          _
        $region40: #{tpu_custom_call.1} parent=11 // pred_fallthru
          _
        // Predicated region
        $region41: #{tpu_custom_call.1} parent=11 // pred_check
          %p473 = pneg %p367
        $region42: #{tpu_custom_call.1} parent=11 // pred_check_branch
          %475 = sbr.rel (%p473) target = $region44
        $region43: #{tpu_custom_call.1} parent=11 // pred_region
          _
        $region44: #{tpu_custom_call.1} parent=11 // pred_fallthru
          _
        // Predicated region
        $region45: #{tpu_custom_call.1} parent=11 // pred_check
          %p476 = pneg %p388
        $region46: #{tpu_custom_call.1} parent=11 // pred_check_branch
          %478 = sbr.rel (%p476) target = $region48
        $region47: #{tpu_custom_call.1} parent=11 // pred_region
          _
        $region48: #{tpu_custom_call.1} parent=11 // pred_fallthru
          _
        // Predicated region
        $region49: #{tpu_custom_call.1} parent=11 // pred_check
          %p479 = pneg %p409
        $region50: #{tpu_custom_call.1} parent=11 // pred_check_branch
          %481 = sbr.rel (%p479) target = $region52
        $region51: #{tpu_custom_call.1} parent=11 // pred_region
          _
        $region52: #{tpu_custom_call.1} parent=11 // pred_fallthru
          _
      $region12: #{tpu_custom_call.1} parent=5 // pred_fallthru
        _
      %p482 = scmp.lt.s32.totalorder %s25, 2
      // Predicated region
      $region53: #{tpu_custom_call.1} parent=5 // pred_check
        %p483 = pneg %p482
      $region54: #{tpu_custom_call.1} parent=5 // pred_check_branch
        %485 = sbr.rel (%p483) target = $region56
      $region55: #{tpu_custom_call.1} parent=5 // pred_region
        // Predicated region
        $region57: #{tpu_custom_call.1} parent=55 // pred_check
          %p486 = pneg %p59
        $region58: #{tpu_custom_call.1} parent=55 // pred_check_branch
          %488 = sbr.rel (%p486) target = $region60
        $region59: #{tpu_custom_call.1} parent=55 // pred_region
          %p489 = scmp.lt.s32.totalorder %s32, 1
          %s490 = scalar_select %p489, %s32, 1
          %p491 = scmp.lt.s32.totalorder %s33, 0
          %s492 = scalar_select %p491, %s33, 0
          %s493 = sadd.s32 %s492, %s490
          %s494 = smul.addr %s493, 8
          %s495 = scalar_lea.vmem %s0, %s494
        $region60: #{tpu_custom_call.1} parent=55 // pred_fallthru
          _
        // Predicated region
        $region61: #{tpu_custom_call.1} parent=55 // pred_check
          %p496 = pneg %p87
        $region62: #{tpu_custom_call.1} parent=55 // pred_check_branch
          %498 = sbr.rel (%p496) target = $region64
        $region63: #{tpu_custom_call.1} parent=55 // pred_region
          %p499 = scmp.lt.s32.totalorder %s32, 1
          %s500 = scalar_select %p499, %s32, 1
          %p501 = scmp.lt.s32.totalorder %s33, 0
          %s502 = scalar_select %p501, %s33, 0
          %s503 = sadd.s32 %s502, %s500
          %s504 = smul.addr %s503, 8
          %s505 = scalar_lea.vmem %s1, %s504
        $region64: #{tpu_custom_call.1} parent=55 // pred_fallthru
          _
        // Predicated region
        $region65: #{tpu_custom_call.1} parent=55 // pred_check
          %p506 = pneg %p113
        $region66: #{tpu_custom_call.1} parent=55 // pred_check_branch
          %508 = sbr.rel (%p506) target = $region68
        $region67: #{tpu_custom_call.1} parent=55 // pred_region
          %p509 = scmp.lt.s32.totalorder %s32, 1
          %s510 = scalar_select %p509, %s32, 1
          %s511 = smul.addr %s510, 8
          %s512 = scalar_lea.vmem %s2, %s511
        $region68: #{tpu_custom_call.1} parent=55 // pred_fallthru
          _
        // Predicated region
        $region69: #{tpu_custom_call.1} parent=55 // pred_check
          %p513 = pneg %p139
        $region70: #{tpu_custom_call.1} parent=55 // pred_check_branch
          %515 = sbr.rel (%p513) target = $region72
        $region71: #{tpu_custom_call.1} parent=55 // pred_region
          %p516 = scmp.lt.s32.totalorder %s32, 1
          %s517 = scalar_select %p516, %s32, 1
          %s518 = smul.addr %s517, 8
          %s519 = scalar_lea.vmem %s3, %s518
        $region72: #{tpu_custom_call.1} parent=55 // pred_fallthru
          _
        // Predicated region
        $region73: #{tpu_custom_call.1} parent=55 // pred_check
          %p520 = pneg %p165
        $region74: #{tpu_custom_call.1} parent=55 // pred_check_branch
          %522 = sbr.rel (%p520) target = $region76
        $region75: #{tpu_custom_call.1} parent=55 // pred_region
          %p523 = scmp.lt.s32.totalorder %s32, 1
          %s524 = scalar_select %p523, %s32, 1
          %s525 = smul.addr %s524, 8
          %s526 = scalar_lea.vmem %s4, %s525
        $region76: #{tpu_custom_call.1} parent=55 // pred_fallthru
          _
        // Predicated region
        $region77: #{tpu_custom_call.1} parent=55 // pred_check
          %p527 = pneg %p193
        $region78: #{tpu_custom_call.1} parent=55 // pred_check_branch
          %529 = sbr.rel (%p527) target = $region80
        $region79: #{tpu_custom_call.1} parent=55 // pred_region
          %p530 = scmp.lt.s32.totalorder %s32, 1
          %s531 = scalar_select %p530, %s32, 1
          %p532 = scmp.lt.s32.totalorder %s33, 0
          %s533 = scalar_select %p532, %s33, 0
          %s534 = sadd.s32 %s533, %s531
          %s535 = smul.addr %s534, 8
          %s536 = scalar_lea.vmem %s5, %s535
        $region80: #{tpu_custom_call.1} parent=55 // pred_fallthru
          _
      $region56: #{tpu_custom_call.1} parent=5 // pred_fallthru
        _
      %p537 = scmp.le.s32.totalorder 1, %s25
      %p538 = scmp.lt.s32.totalorder %s25, 3
      %p539 = pnand %p537, %p538
      %p540 = pneg %p539
      // Predicated region
      $region81: #{tpu_custom_call.1} parent=5 // pred_check
        _
      $region82: #{tpu_custom_call.1} parent=5 // pred_check_branch
        %542 = sbr.rel (%p539) target = $region84
      $region83: #{tpu_custom_call.1} parent=5 // pred_region
        %s543 = ssub.s32 %s25, 1
        %p544 = scmp.lt.s32.totalorder %s34, 1
        %s545 = scalar_select %p544, %s34, 1
        %p546 = scmp.lt.s32.totalorder %s35, 0
        %s547 = scalar_select %p546, %s35, 0
        %s548 = sadd.s32 %s547, %s545
        %s549 = smul.addr %s548, 8
        %s550 = scalar_lea.vmem %s0, %s549
        %p551 = pneg %p65
        %p552 = pneg %p62
        %p553 = scmp.lt.s32.totalorder %s34, 1
        %s554 = scalar_select %p553, %s34, 1
        %p555 = scmp.lt.s32.totalorder %s35, 0
        %s556 = scalar_select %p555, %s35, 0
        %s557 = sadd.s32 %s556, %s554
        %s558 = smul.addr %s557, 8
        %s559 = scalar_lea.vmem %s1, %s558
        %p560 = pneg %p93
        %p561 = pneg %p90
        %p562 = scmp.lt.s32.totalorder %s34, 1
        %s563 = scalar_select %p562, %s34, 1
        %s564 = smul.addr %s563, 8
        %s565 = scalar_lea.vmem %s2, %s564
        %p566 = pneg %p119
        %p567 = pneg %p116
        %p568 = scmp.lt.s32.totalorder %s34, 1
        %s569 = scalar_select %p568, %s34, 1
        %s570 = smul.addr %s569, 8
        %s571 = scalar_lea.vmem %s3, %s570
        %p572 = pneg %p145
        %p573 = pneg %p142
        %p574 = scmp.lt.s32.totalorder %s34, 1
        %s575 = scalar_select %p574, %s34, 1
        %s576 = smul.addr %s575, 8
        %s577 = scalar_lea.vmem %s4, %s576
        %p578 = pneg %p171
        %p579 = pneg %p168
        %p580 = scmp.lt.s32.totalorder %s34, 1
        %s581 = scalar_select %p580, %s34, 1
        %p582 = scmp.lt.s32.totalorder %s35, 0
        %s583 = scalar_select %p582, %s35, 0
        %s584 = sadd.s32 %s583, %s581
        %s585 = smul.addr %s584, 8
        %s586 = scalar_lea.vmem %s5, %s585
        %p587 = pneg %p199
        %p588 = pneg %p196
        %p589 = pneg %p220
        %p590 = pneg %p217
        %p591 = pneg %p241
        %p592 = pneg %p238
        %p593 = pneg %p262
        %p594 = pneg %p259
        %p595 = pneg %p283
        %p596 = pneg %p280
        %p597 = pneg %p304
        %p598 = pneg %p301
        %p599 = pneg %p325
        %p600 = pneg %p322
        %p601 = pneg %p346
        %p602 = pneg %p343
        %p603 = pneg %p367
        %p604 = pneg %p364
        %p605 = pneg %p388
        %p606 = pneg %p385
        %p607 = pneg %p409
        %p608 = pneg %p406
        %p609 = pneg %p437
        %p610 = pneg %p434
        %s611 = sand.u32 %s424, 1
        %s612 = scalar_lea.sflag [#allocation7], %s611
        %s613 = sand.u32 %s424, 1
        %s614 = smul.addr %s613, 8
        %s615 = scalar_lea.vmem [#allocation6], %s614
        %p616 = scmp.lt.s32.totalorder %s34, 1
        %s617 = scalar_select %p616, %s34, 1
        %p618 = scmp.lt.s32.totalorder %s35, 0
        %s619 = scalar_select %p618, %s35, 0
        %s620 = sadd.s32 %s619, %s617
        %s621 = smul.addr %s620, 8
        %s622 = scalar_lea.vmem %s0, %s621
        %p623 = scmp.lt.s32.totalorder %s34, 1
        %s624 = scalar_select %p623, %s34, 1
        %p625 = scmp.lt.s32.totalorder %s35, 0
        %s626 = scalar_select %p625, %s35, 0
        %s627 = sadd.s32 %s626, %s624
        %s628 = smul.addr %s627, 8
        %s629 = scalar_lea.vmem %s1, %s628
        %p630 = scmp.lt.s32.totalorder %s34, 1
        %s631 = scalar_select %p630, %s34, 1
        %s632 = smul.addr %s631, 8
        %s633 = scalar_lea.vmem %s2, %s632
        %p634 = scmp.lt.s32.totalorder %s34, 1
        %s635 = scalar_select %p634, %s34, 1
        %s636 = smul.addr %s635, 8
        %s637 = scalar_lea.vmem %s3, %s636
        %p638 = scmp.lt.s32.totalorder %s34, 1
        %s639 = scalar_select %p638, %s34, 1
        %s640 = smul.addr %s639, 8
        %s641 = scalar_lea.vmem %s4, %s640
        %p642 = scmp.lt.s32.totalorder %s34, 1
        %s643 = scalar_select %p642, %s34, 1
        %p644 = scmp.lt.s32.totalorder %s35, 0
        %s645 = scalar_select %p644, %s35, 0
        %s646 = sadd.s32 %s645, %s643
        %s647 = smul.addr %s646, 8
        %s648 = scalar_lea.vmem %s5, %s647
        %v650 = vld [vmem:[%s622] sm:$0xff]
        %v651 = vld [vmem:[%s629] sm:$0xff]
        %v652 = vadd.f32 %v650, %v651
        %v653 = vld [vmem:[%s633] sm:$0xff]
        %v654 = vld [vmem:[%s637] sm:$0xff]
        %v655 = vadd.f32 %v653, %v654
        %v656 = vld [vmem:[%s641] sm:$0xff]
        %v657 = vpack.c.bf16 %v652, %v652
        %v658 = vpack.c.bf16 %v655, %v655
        %v659 = vpack.c.bf16 %v656, %v656
        %v660 = vld [vmem:[%s6] sm:$0xf]
        %v661 = vld [vmem:[%s6 + $0x4] sm:$0xf]
        %v662 = vld [vmem:[%s6 + $0x8] sm:$0xf]
        %v663 = vld [vmem:[%s6 + $0xc] sm:$0xf]
        %v664 = vld [vmem:[%s7] sm:$0x1]
        %v666 = vlaneseq
        %v667 = vshrl.u32 %v666, 7
        %v668 = vsub.s32 0, %v667
        %v669 = vrot.slane %v664, %v668
        %v675 = vunpack.c.l.b16 %v660
        %v676 = vunpack.c.l.b16 %v661
        %v677 = vunpack.c.l.b16 %v662
        %v678 = vunpack.c.l.b16 %v663
        %v679 = vpack.c.b16 %v676, %v675
        %v680 = vpack.c.b16 %v678, %v677
        %vm683 = vcmask 261120
        %v685 = vsel %vm683, %v657, 0
        %687 = vmatprep.subr.bf16.mxu0 0
        %688 = vmatpush1.bf16.msra.mxu0 %v679
        %689 = vmatprep.subr.bf16.mxu0 0
        %690 = vmatpush1.bf16.msra.mxu0 %v680
        %691 = vmatprep.subr.bf16.mxu0 0
        %692 = vmatpush1.bf16.msra.mxu0 0
        %693 = vmatprep.subr.bf16.mxu0 0
        %694 = vmatpush1.bf16.msra.mxu0 0
        %695 = vmatprep.subr.bf16.mxu0 0
        %696 = vmatpush1.bf16.msra.mxu0 0
        %697 = vmatprep.subr.bf16.mxu0 0
        %698 = vmatpush1.bf16.msra.mxu0 0
        %699 = vmatprep.subr.bf16.mxu0 0
        %700 = vmatpush1.bf16.msra.mxu0 0
        %701 = vmatprep.subr.bf16.mxu0 0
        %702 = vmatpush1.bf16.msra.mxu0 0
        %703 = vmatprep.subr.bf16.mxu0 0
        %704 = vmatpush1.bf16.msra.mxu0 0
        %705 = vmatprep.subr.bf16.mxu0 0
        %706 = vmatpush1.bf16.msra.mxu0 0
        %707 = vmatprep.subr.bf16.mxu0 0
        %708 = vmatpush1.bf16.msra.mxu0 0
        %709 = vmatprep.subr.bf16.mxu0 0
        %710 = vmatpush1.bf16.msra.mxu0 0
        %711 = vmatprep.subr.bf16.mxu0 0
        %712 = vmatpush1.bf16.msra.mxu0 0
        %713 = vmatprep.subr.bf16.mxu0 0
        %714 = vmatpush1.bf16.msra.mxu0 0
        %715 = vmatprep.subr.bf16.mxu0 0
        %716 = vmatpush1.bf16.msra.mxu0 0
        %717 = vmatprep.subr.bf16.mxu0 0
        %718 = vmatpush1.bf16.msra.mxu0 0
        %719 = vmatprep.mubr.bf16.mxu0 0
        %720 = vmatmul.mubr.bf16.gmra.mrb[0].mxu0 %v685
        %v721 = vpop.f32.mrb[0].mxu0
        %v722 = vadd.f32 %v669, %v721
        %v723 = vpop.f32.mrb[0].mxu0
        %v724 = vpop.f32.mrb[0].mxu0
        %v725 = vpop.f32.mrb[0].mxu0
        %726 = vdwg.mxu0
        %vm727 = vcmask 64512
        %728 = vst.msk [vmem:[#allocation2] sm:$0xff] %vm727, %v722
        %v729 = vld [vmem:[%s8] sm:$0xf]
        %v730 = vld [vmem:[%s8 + $0x4] sm:$0xf]
        %v731 = vld [vmem:[%s8 + $0x8] sm:$0xf]
        %v732 = vld [vmem:[%s8 + $0xc] sm:$0xf]
        %v733 = vld [vmem:[%s9] sm:$0x1]
        %v735 = vlaneseq
        %v736 = vshrl.u32 %v735, 7
        %v737 = vsub.s32 0, %v736
        %v738 = vrot.slane %v733, %v737
        %v744 = vunpack.c.l.b16 %v729
        %v745 = vunpack.c.l.b16 %v730
        %v746 = vunpack.c.l.b16 %v731
        %v747 = vunpack.c.l.b16 %v732
        %v748 = vpack.c.b16 %v745, %v744
        %v749 = vpack.c.b16 %v747, %v746
        %v753 = vsel %vm683, %v658, 0
        %755 = vmatprep.subr.bf16.mxu0 0
        %756 = vmatpush1.bf16.msra.mxu0 %v748
        %757 = vmatprep.subr.bf16.mxu0 0
        %758 = vmatpush1.bf16.msra.mxu0 %v749
        %759 = vmatprep.subr.bf16.mxu0 0
        %760 = vmatpush1.bf16.msra.mxu0 0
        %761 = vmatprep.subr.bf16.mxu0 0
        %762 = vmatpush1.bf16.msra.mxu0 0
        %763 = vmatprep.subr.bf16.mxu0 0
        %764 = vmatpush1.bf16.msra.mxu0 0
        %765 = vmatprep.subr.bf16.mxu0 0
        %766 = vmatpush1.bf16.msra.mxu0 0
        %767 = vmatprep.subr.bf16.mxu0 0
        %768 = vmatpush1.bf16.msra.mxu0 0
        %769 = vmatprep.subr.bf16.mxu0 0
        %770 = vmatpush1.bf16.msra.mxu0 0
        %771 = vmatprep.subr.bf16.mxu0 0
        %772 = vmatpush1.bf16.msra.mxu0 0
        %773 = vmatprep.subr.bf16.mxu0 0
        %774 = vmatpush1.bf16.msra.mxu0 0
        %775 = vmatprep.subr.bf16.mxu0 0
        %776 = vmatpush1.bf16.msra.mxu0 0
        %777 = vmatprep.subr.bf16.mxu0 0
        %778 = vmatpush1.bf16.msra.mxu0 0
        %779 = vmatprep.subr.bf16.mxu0 0
        %780 = vmatpush1.bf16.msra.mxu0 0
        %781 = vmatprep.subr.bf16.mxu0 0
        %782 = vmatpush1.bf16.msra.mxu0 0
        %783 = vmatprep.subr.bf16.mxu0 0
        %784 = vmatpush1.bf16.msra.mxu0 0
        %785 = vmatprep.subr.bf16.mxu0 0
        %786 = vmatpush1.bf16.msra.mxu0 0
        %787 = vmatprep.mubr.bf16.mxu0 0
        %788 = vmatmul.mubr.bf16.gmra.mrb[0].mxu0 %v753
        %v789 = vpop.f32.mrb[0].mxu0
        %v790 = vadd.f32 %v738, %v789
        %v791 = vpop.f32.mrb[0].mxu0
        %v792 = vpop.f32.mrb[0].mxu0
        %v793 = vpop.f32.mrb[0].mxu0
        %794 = vdwg.mxu0
        %795 = vst.msk [vmem:[#allocation3] sm:$0xff] %vm727, %v790
        %v796 = vld [vmem:[%s10] sm:$0xf]
        %v797 = vld [vmem:[%s10 + $0x4] sm:$0xf]
        %v798 = vld [vmem:[%s10 + $0x8] sm:$0xf]
        %v799 = vld [vmem:[%s10 + $0xc] sm:$0xf]
        %v800 = vld [vmem:[%s11] sm:$0x1]
        %v802 = vlaneseq
        %v803 = vshrl.u32 %v802, 7
        %v804 = vsub.s32 0, %v803
        %v805 = vrot.slane %v800, %v804
        %v811 = vunpack.c.l.b16 %v796
        %v812 = vunpack.c.l.b16 %v797
        %v813 = vunpack.c.l.b16 %v798
        %v814 = vunpack.c.l.b16 %v799
        %v815 = vpack.c.b16 %v812, %v811
        %v816 = vpack.c.b16 %v814, %v813
        %v820 = vsel %vm683, %v659, 0
        %822 = vmatprep.subr.bf16.mxu0 0
        %823 = vmatpush1.bf16.msra.mxu0 %v815
        %824 = vmatprep.subr.bf16.mxu0 0
        %825 = vmatpush1.bf16.msra.mxu0 %v816
        %826 = vmatprep.subr.bf16.mxu0 0
        %827 = vmatpush1.bf16.msra.mxu0 0
        %828 = vmatprep.subr.bf16.mxu0 0
        %829 = vmatpush1.bf16.msra.mxu0 0
        %830 = vmatprep.subr.bf16.mxu0 0
        %831 = vmatpush1.bf16.msra.mxu0 0
        %832 = vmatprep.subr.bf16.mxu0 0
        %833 = vmatpush1.bf16.msra.mxu0 0
        %834 = vmatprep.subr.bf16.mxu0 0
        %835 = vmatpush1.bf16.msra.mxu0 0
        %836 = vmatprep.subr.bf16.mxu0 0
        %837 = vmatpush1.bf16.msra.mxu0 0
        %838 = vmatprep.subr.bf16.mxu0 0
        %839 = vmatpush1.bf16.msra.mxu0 0
        %840 = vmatprep.subr.bf16.mxu0 0
        %841 = vmatpush1.bf16.msra.mxu0 0
        %842 = vmatprep.subr.bf16.mxu0 0
        %843 = vmatpush1.bf16.msra.mxu0 0
        %844 = vmatprep.subr.bf16.mxu0 0
        %845 = vmatpush1.bf16.msra.mxu0 0
        %846 = vmatprep.subr.bf16.mxu0 0
        %847 = vmatpush1.bf16.msra.mxu0 0
        %848 = vmatprep.subr.bf16.mxu0 0
        %849 = vmatpush1.bf16.msra.mxu0 0
        %850 = vmatprep.subr.bf16.mxu0 0
        %851 = vmatpush1.bf16.msra.mxu0 0
        %852 = vmatprep.subr.bf16.mxu0 0
        %853 = vmatpush1.bf16.msra.mxu0 0
        %854 = vmatprep.mubr.bf16.mxu0 0
        %855 = vmatmul.mubr.bf16.gmra.mrb[0].mxu0 %v820
        %v856 = vpop.f32.mrb[0].mxu0
        %v857 = vadd.f32 %v805, %v856
        %v858 = vpop.f32.mrb[0].mxu0
        %v859 = vpop.f32.mrb[0].mxu0
        %v860 = vpop.f32.mrb[0].mxu0
        %861 = vdwg.mxu0
        %862 = vst.msk [vmem:[#allocation4] sm:$0xff] %vm727, %v857
        %s863 = scalar_lea.vmem %s6, 16
        %v864 = vld [vmem:[%s863] sm:$0xf]
        %v865 = vld [vmem:[%s863 + $0x4] sm:$0xf]
        %v866 = vld [vmem:[%s863 + $0x8] sm:$0xf]
        %v867 = vld [vmem:[%s863 + $0xc] sm:$0xf]
        %s868 = scalar_lea.vmem %s7, 1
        %v869 = vld [vmem:[%s868] sm:$0x1]
        %v871 = vlaneseq
        %v872 = vshrl.u32 %v871, 7
        %v873 = vsub.s32 0, %v872
        %v874 = vrot.slane %v869, %v873
        %v880 = vunpack.c.l.b16 %v864
        %v881 = vunpack.c.l.b16 %v865
        %v882 = vunpack.c.l.b16 %v866
        %v883 = vunpack.c.l.b16 %v867
        %v884 = vpack.c.b16 %v881, %v880
        %v885 = vpack.c.b16 %v883, %v882
        %888 = vmatprep.subr.bf16.mxu0 0
        %889 = vmatpush1.bf16.msra.mxu0 %v884
        %890 = vmatprep.subr.bf16.mxu0 0
        %891 = vmatpush1.bf16.msra.mxu0 %v885
        %892 = vmatprep.subr.bf16.mxu0 0
        %893 = vmatpush1.bf16.msra.mxu0 0
        %894 = vmatprep.subr.bf16.mxu0 0
        %895 = vmatpush1.bf16.msra.mxu0 0
        %896 = vmatprep.subr.bf16.mxu0 0
        %897 = vmatpush1.bf16.msra.mxu0 0
        %898 = vmatprep.subr.bf16.mxu0 0
        %899 = vmatpush1.bf16.msra.mxu0 0
        %900 = vmatprep.subr.bf16.mxu0 0
        %901 = vmatpush1.bf16.msra.mxu0 0
        %902 = vmatprep.subr.bf16.mxu0 0
        %903 = vmatpush1.bf16.msra.mxu0 0
        %904 = vmatprep.subr.bf16.mxu0 0
        %905 = vmatpush1.bf16.msra.mxu0 0
        %906 = vmatprep.subr.bf16.mxu0 0
        %907 = vmatpush1.bf16.msra.mxu0 0
        %908 = vmatprep.subr.bf16.mxu0 0
        %909 = vmatpush1.bf16.msra.mxu0 0
        %910 = vmatprep.subr.bf16.mxu0 0
        %911 = vmatpush1.bf16.msra.mxu0 0
        %912 = vmatprep.subr.bf16.mxu0 0
        %913 = vmatpush1.bf16.msra.mxu0 0
        %914 = vmatprep.subr.bf16.mxu0 0
        %915 = vmatpush1.bf16.msra.mxu0 0
        %916 = vmatprep.subr.bf16.mxu0 0
        %917 = vmatpush1.bf16.msra.mxu0 0
        %918 = vmatprep.subr.bf16.mxu0 0
        %919 = vmatpush1.bf16.msra.mxu0 0
        %920 = vmatprep.mubr.bf16.mxu0 0
        %921 = vmatmul.mubr.bf16.gmra.mrb[0].mxu0 %v685
        %v922 = vpop.f32.mrb[0].mxu0
        %v923 = vadd.f32 %v874, %v922
        %v924 = vpop.f32.mrb[0].mxu0
        %v925 = vpop.f32.mrb[0].mxu0
        %v926 = vpop.f32.mrb[0].mxu0
        %927 = vdwg.mxu0
        %s928 = scalar_lea.vmem [#allocation2], 8
        %929 = vst.msk [vmem:[%s928] sm:$0xff] %vm727, %v923
        %s930 = scalar_lea.vmem %s8, 16
        %v931 = vld [vmem:[%s930] sm:$0xf]
        %v932 = vld [vmem:[%s930 + $0x4] sm:$0xf]
        %v933 = vld [vmem:[%s930 + $0x8] sm:$0xf]
        %v934 = vld [vmem:[%s930 + $0xc] sm:$0xf]
        %s935 = scalar_lea.vmem %s9, 1
        %v936 = vld [vmem:[%s935] sm:$0x1]
        %v938 = vlaneseq
        %v939 = vshrl.u32 %v938, 7
        %v940 = vsub.s32 0, %v939
        %v941 = vrot.slane %v936, %v940
        %v947 = vunpack.c.l.b16 %v931
        %v948 = vunpack.c.l.b16 %v932
        %v949 = vunpack.c.l.b16 %v933
        %v950 = vunpack.c.l.b16 %v934
        %v951 = vpack.c.b16 %v948, %v947
        %v952 = vpack.c.b16 %v950, %v949
        %955 = vmatprep.subr.bf16.mxu0 0
        %956 = vmatpush1.bf16.msra.mxu0 %v951
        %957 = vmatprep.subr.bf16.mxu0 0
        %958 = vmatpush1.bf16.msra.mxu0 %v952
        %959 = vmatprep.subr.bf16.mxu0 0
        %960 = vmatpush1.bf16.msra.mxu0 0
        %961 = vmatprep.subr.bf16.mxu0 0
        %962 = vmatpush1.bf16.msra.mxu0 0
        %963 = vmatprep.subr.bf16.mxu0 0
        %964 = vmatpush1.bf16.msra.mxu0 0
        %965 = vmatprep.subr.bf16.mxu0 0
        %966 = vmatpush1.bf16.msra.mxu0 0
        %967 = vmatprep.subr.bf16.mxu0 0
        %968 = vmatpush1.bf16.msra.mxu0 0
        %969 = vmatprep.subr.bf16.mxu0 0
        %970 = vmatpush1.bf16.msra.mxu0 0
        %971 = vmatprep.subr.bf16.mxu0 0
        %972 = vmatpush1.bf16.msra.mxu0 0
        %973 = vmatprep.subr.bf16.mxu0 0
        %974 = vmatpush1.bf16.msra.mxu0 0
        %975 = vmatprep.subr.bf16.mxu0 0
        %976 = vmatpush1.bf16.msra.mxu0 0
        %977 = vmatprep.subr.bf16.mxu0 0
        %978 = vmatpush1.bf16.msra.mxu0 0
        %979 = vmatprep.subr.bf16.mxu0 0
        %980 = vmatpush1.bf16.msra.mxu0 0
        %981 = vmatprep.subr.bf16.mxu0 0
        %982 = vmatpush1.bf16.msra.mxu0 0
        %983 = vmatprep.subr.bf16.mxu0 0
        %984 = vmatpush1.bf16.msra.mxu0 0
        %985 = vmatprep.subr.bf16.mxu0 0
        %986 = vmatpush1.bf16.msra.mxu0 0
        %987 = vmatprep.mubr.bf16.mxu0 0
        %988 = vmatmul.mubr.bf16.gmra.mrb[0].mxu0 %v753
        %v989 = vpop.f32.mrb[0].mxu0
        %v990 = vadd.f32 %v941, %v989
        %v991 = vpop.f32.mrb[0].mxu0
        %v992 = vpop.f32.mrb[0].mxu0
        %v993 = vpop.f32.mrb[0].mxu0
        %994 = vdwg.mxu0
        %s995 = scalar_lea.vmem [#allocation3], 8
        %996 = vst.msk [vmem:[%s995] sm:$0xff] %vm727, %v990
        %s997 = scalar_lea.vmem %s10, 16
        %v998 = vld [vmem:[%s997] sm:$0xf]
        %v999 = vld [vmem:[%s997 + $0x4] sm:$0xf]
        %v1000 = vld [vmem:[%s997 + $0x8] sm:$0xf]
        %v1001 = vld [vmem:[%s997 + $0xc] sm:$0xf]
        %s1002 = scalar_lea.vmem %s11, 1
        %v1003 = vld [vmem:[%s1002] sm:$0x1]
        %v1005 = vlaneseq
        %v1006 = vshrl.u32 %v1005, 7
        %v1007 = vsub.s32 0, %v1006
        %v1008 = vrot.slane %v1003, %v1007
        %v1014 = vunpack.c.l.b16 %v998
        %v1015 = vunpack.c.l.b16 %v999
        %v1016 = vunpack.c.l.b16 %v1000
        %v1017 = vunpack.c.l.b16 %v1001
        %v1018 = vpack.c.b16 %v1015, %v1014
        %v1019 = vpack.c.b16 %v1017, %v1016
        %1022 = vmatprep.subr.bf16.mxu0 0
        %1023 = vmatpush1.bf16.msra.mxu0 %v1018
        %1024 = vmatprep.subr.bf16.mxu0 0
        %1025 = vmatpush1.bf16.msra.mxu0 %v1019
        %1026 = vmatprep.subr.bf16.mxu0 0
        %1027 = vmatpush1.bf16.msra.mxu0 0
        %1028 = vmatprep.subr.bf16.mxu0 0
        %1029 = vmatpush1.bf16.msra.mxu0 0
        %1030 = vmatprep.subr.bf16.mxu0 0
        %1031 = vmatpush1.bf16.msra.mxu0 0
        %1032 = vmatprep.subr.bf16.mxu0 0
        %1033 = vmatpush1.bf16.msra.mxu0 0
        %1034 = vmatprep.subr.bf16.mxu0 0
        %1035 = vmatpush1.bf16.msra.mxu0 0
        %1036 = vmatprep.subr.bf16.mxu0 0
        %1037 = vmatpush1.bf16.msra.mxu0 0
        %1038 = vmatprep.subr.bf16.mxu0 0
        %1039 = vmatpush1.bf16.msra.mxu0 0
        %1040 = vmatprep.subr.bf16.mxu0 0
        %1041 = vmatpush1.bf16.msra.mxu0 0
        %1042 = vmatprep.subr.bf16.mxu0 0
        %1043 = vmatpush1.bf16.msra.mxu0 0
        %1044 = vmatprep.subr.bf16.mxu0 0
        %1045 = vmatpush1.bf16.msra.mxu0 0
        %1046 = vmatprep.subr.bf16.mxu0 0
        %1047 = vmatpush1.bf16.msra.mxu0 0
        %1048 = vmatprep.subr.bf16.mxu0 0
        %1049 = vmatpush1.bf16.msra.mxu0 0
        %1050 = vmatprep.subr.bf16.mxu0 0
        %1051 = vmatpush1.bf16.msra.mxu0 0
        %1052 = vmatprep.subr.bf16.mxu0 0
        %1053 = vmatpush1.bf16.msra.mxu0 0
        %1054 = vmatprep.mubr.bf16.mxu0 0
        %1055 = vmatmul.mubr.bf16.gmra.mrb[0].mxu0 %v820
        %v1056 = vpop.f32.mrb[0].mxu0
        %v1057 = vadd.f32 %v1008, %v1056
        %v1058 = vpop.f32.mrb[0].mxu0
        %v1059 = vpop.f32.mrb[0].mxu0
        %v1060 = vpop.f32.mrb[0].mxu0
        %1061 = vdwg.mxu0
        %s1062 = scalar_lea.vmem [#allocation4], 8
        %1063 = vst.msk [vmem:[%s1062] sm:$0xff] %vm727, %v1057
        %s1064 = scalar_lea.vmem %s6, 32
        %v1065 = vld [vmem:[%s1064] sm:$0xf]
        %v1066 = vld [vmem:[%s1064 + $0x4] sm:$0xf]
        %v1067 = vld [vmem:[%s1064 + $0x8] sm:$0xf]
        %v1068 = vld [vmem:[%s1064 + $0xc] sm:$0xf]
        %s1069 = scalar_lea.vmem %s7, 2
        %v1070 = vld [vmem:[%s1069] sm:$0x1]
        %v1072 = vlaneseq
        %v1073 = vshrl.u32 %v1072, 7
        %v1074 = vsub.s32 0, %v1073
        %v1075 = vrot.slane %v1070, %v1074
        %v1081 = vunpack.c.l.b16 %v1065
        %v1082 = vunpack.c.l.b16 %v1066
        %v1083 = vunpack.c.l.b16 %v1067
        %v1084 = vunpack.c.l.b16 %v1068
        %v1085 = vpack.c.b16 %v1082, %v1081
        %v1086 = vpack.c.b16 %v1084, %v1083
        %1089 = vmatprep.subr.bf16.mxu0 0
        %1090 = vmatpush1.bf16.msra.mxu0 %v1085
        %1091 = vmatprep.subr.bf16.mxu0 0
        %1092 = vmatpush1.bf16.msra.mxu0 %v1086
        %1093 = vmatprep.subr.bf16.mxu0 0
        %1094 = vmatpush1.bf16.msra.mxu0 0
        %1095 = vmatprep.subr.bf16.mxu0 0
        %1096 = vmatpush1.bf16.msra.mxu0 0
        %1097 = vmatprep.subr.bf16.mxu0 0
        %1098 = vmatpush1.bf16.msra.mxu0 0
        %1099 = vmatprep.subr.bf16.mxu0 0
        %1100 = vmatpush1.bf16.msra.mxu0 0
        %1101 = vmatprep.subr.bf16.mxu0 0
        %1102 = vmatpush1.bf16.msra.mxu0 0
        %1103 = vmatprep.subr.bf16.mxu0 0
        %1104 = vmatpush1.bf16.msra.mxu0 0
        %1105 = vmatprep.subr.bf16.mxu0 0
        %1106 = vmatpush1.bf16.msra.mxu0 0
        %1107 = vmatprep.subr.bf16.mxu0 0
        %1108 = vmatpush1.bf16.msra.mxu0 0
        %1109 = vmatprep.subr.bf16.mxu0 0
        %1110 = vmatpush1.bf16.msra.mxu0 0
        %1111 = vmatprep.subr.bf16.mxu0 0
        %1112 = vmatpush1.bf16.msra.mxu0 0
        %1113 = vmatprep.subr.bf16.mxu0 0
        %1114 = vmatpush1.bf16.msra.mxu0 0
        %1115 = vmatprep.subr.bf16.mxu0 0
        %1116 = vmatpush1.bf16.msra.mxu0 0
        %1117 = vmatprep.subr.bf16.mxu0 0
        %1118 = vmatpush1.bf16.msra.mxu0 0
        %1119 = vmatprep.subr.bf16.mxu0 0
        %1120 = vmatpush1.bf16.msra.mxu0 0
        %1121 = vmatprep.mubr.bf16.mxu0 0
        %1122 = vmatmul.mubr.bf16.gmra.mrb[0].mxu0 %v685
        %v1123 = vpop.f32.mrb[0].mxu0
        %v1124 = vadd.f32 %v1075, %v1123
        %v1125 = vpop.f32.mrb[0].mxu0
        %v1126 = vpop.f32.mrb[0].mxu0
        %v1127 = vpop.f32.mrb[0].mxu0
        %1128 = vdwg.mxu0
        %s1129 = scalar_lea.vmem [#allocation2], 16
        %1130 = vst.msk [vmem:[%s1129] sm:$0xff] %vm727, %v1124
        %s1131 = scalar_lea.vmem %s8, 32
        %v1132 = vld [vmem:[%s1131] sm:$0xf]
        %v1133 = vld [vmem:[%s1131 + $0x4] sm:$0xf]
        %v1134 = vld [vmem:[%s1131 + $0x8] sm:$0xf]
        %v1135 = vld [vmem:[%s1131 + $0xc] sm:$0xf]
        %s1136 = scalar_lea.vmem %s9, 2
        %v1137 = vld [vmem:[%s1136] sm:$0x1]
        %v1139 = vlaneseq
        %v1140 = vshrl.u32 %v1139, 7
        %v1141 = vsub.s32 0, %v1140
        %v1142 = vrot.slane %v1137, %v1141
        %v1148 = vunpack.c.l.b16 %v1132
        %v1149 = vunpack.c.l.b16 %v1133
        %v1150 = vunpack.c.l.b16 %v1134
        %v1151 = vunpack.c.l.b16 %v1135
        %v1152 = vpack.c.b16 %v1149, %v1148
        %v1153 = vpack.c.b16 %v1151, %v1150
        %1156 = vmatprep.subr.bf16.mxu0 0
        %1157 = vmatpush1.bf16.msra.mxu0 %v1152
        %1158 = vmatprep.subr.bf16.mxu0 0
        %1159 = vmatpush1.bf16.msra.mxu0 %v1153
        %1160 = vmatprep.subr.bf16.mxu0 0
        %1161 = vmatpush1.bf16.msra.mxu0 0
        %1162 = vmatprep.subr.bf16.mxu0 0
        %1163 = vmatpush1.bf16.msra.mxu0 0
        %1164 = vmatprep.subr.bf16.mxu0 0
        %1165 = vmatpush1.bf16.msra.mxu0 0
        %1166 = vmatprep.subr.bf16.mxu0 0
        %1167 = vmatpush1.bf16.msra.mxu0 0
        %1168 = vmatprep.subr.bf16.mxu0 0
        %1169 = vmatpush1.bf16.msra.mxu0 0
        %1170 = vmatprep.subr.bf16.mxu0 0
        %1171 = vmatpush1.bf16.msra.mxu0 0
        %1172 = vmatprep.subr.bf16.mxu0 0
        %1173 = vmatpush1.bf16.msra.mxu0 0
        %1174 = vmatprep.subr.bf16.mxu0 0
        %1175 = vmatpush1.bf16.msra.mxu0 0
        %1176 = vmatprep.subr.bf16.mxu0 0
        %1177 = vmatpush1.bf16.msra.mxu0 0
        %1178 = vmatprep.subr.bf16.mxu0 0
        %1179 = vmatpush1.bf16.msra.mxu0 0
        %1180 = vmatprep.subr.bf16.mxu0 0
        %1181 = vmatpush1.bf16.msra.mxu0 0
        %1182 = vmatprep.subr.bf16.mxu0 0
        %1183 = vmatpush1.bf16.msra.mxu0 0
        %1184 = vmatprep.subr.bf16.mxu0 0
        %1185 = vmatpush1.bf16.msra.mxu0 0
        %1186 = vmatprep.subr.bf16.mxu0 0
        %1187 = vmatpush1.bf16.msra.mxu0 0
        %1188 = vmatprep.mubr.bf16.mxu0 0
        %1189 = vmatmul.mubr.bf16.gmra.mrb[0].mxu0 %v753
        %v1190 = vpop.f32.mrb[0].mxu0
        %v1191 = vadd.f32 %v1142, %v1190
        %v1192 = vpop.f32.mrb[0].mxu0
        %v1193 = vpop.f32.mrb[0].mxu0
        %v1194 = vpop.f32.mrb[0].mxu0
        %1195 = vdwg.mxu0
        %s1196 = scalar_lea.vmem [#allocation3], 16
        %1197 = vst.msk [vmem:[%s1196] sm:$0xff] %vm727, %v1191
        %s1198 = scalar_lea.vmem %s10, 32
        %v1199 = vld [vmem:[%s1198] sm:$0xf]
        %v1200 = vld [vmem:[%s1198 + $0x4] sm:$0xf]
        %v1201 = vld [vmem:[%s1198 + $0x8] sm:$0xf]
        %v1202 = vld [vmem:[%s1198 + $0xc] sm:$0xf]
        %s1203 = scalar_lea.vmem %s11, 2
        %v1204 = vld [vmem:[%s1203] sm:$0x1]
        %v1206 = vlaneseq
        %v1207 = vshrl.u32 %v1206, 7
        %v1208 = vsub.s32 0, %v1207
        %v1209 = vrot.slane %v1204, %v1208
        %v1215 = vunpack.c.l.b16 %v1199
        %v1216 = vunpack.c.l.b16 %v1200
        %v1217 = vunpack.c.l.b16 %v1201
        %v1218 = vunpack.c.l.b16 %v1202
        %v1219 = vpack.c.b16 %v1216, %v1215
        %v1220 = vpack.c.b16 %v1218, %v1217
        %1223 = vmatprep.subr.bf16.mxu0 0
        %1224 = vmatpush1.bf16.msra.mxu0 %v1219
        %1225 = vmatprep.subr.bf16.mxu0 0
        %1226 = vmatpush1.bf16.msra.mxu0 %v1220
        %1227 = vmatprep.subr.bf16.mxu0 0
        %1228 = vmatpush1.bf16.msra.mxu0 0
        %1229 = vmatprep.subr.bf16.mxu0 0
        %1230 = vmatpush1.bf16.msra.mxu0 0
        %1231 = vmatprep.subr.bf16.mxu0 0
        %1232 = vmatpush1.bf16.msra.mxu0 0
        %1233 = vmatprep.subr.bf16.mxu0 0
        %1234 = vmatpush1.bf16.msra.mxu0 0
        %1235 = vmatprep.subr.bf16.mxu0 0
        %1236 = vmatpush1.bf16.msra.mxu0 0
        %1237 = vmatprep.subr.bf16.mxu0 0
        %1238 = vmatpush1.bf16.msra.mxu0 0
        %1239 = vmatprep.subr.bf16.mxu0 0
        %1240 = vmatpush1.bf16.msra.mxu0 0
        %1241 = vmatprep.subr.bf16.mxu0 0
        %1242 = vmatpush1.bf16.msra.mxu0 0
        %1243 = vmatprep.subr.bf16.mxu0 0
        %1244 = vmatpush1.bf16.msra.mxu0 0
        %1245 = vmatprep.subr.bf16.mxu0 0
        %1246 = vmatpush1.bf16.msra.mxu0 0
        %1247 = vmatprep.subr.bf16.mxu0 0
        %1248 = vmatpush1.bf16.msra.mxu0 0
        %1249 = vmatprep.subr.bf16.mxu0 0
        %1250 = vmatpush1.bf16.msra.mxu0 0
        %1251 = vmatprep.subr.bf16.mxu0 0
        %1252 = vmatpush1.bf16.msra.mxu0 0
        %1253 = vmatprep.subr.bf16.mxu0 0
        %1254 = vmatpush1.bf16.msra.mxu0 0
        %1255 = vmatprep.mubr.bf16.mxu0 0
        %1256 = vmatmul.mubr.bf16.gmra.mrb[0].mxu0 %v820
        %v1257 = vpop.f32.mrb[0].mxu0
        %v1258 = vadd.f32 %v1209, %v1257
        %v1259 = vpop.f32.mrb[0].mxu0
        %v1260 = vpop.f32.mrb[0].mxu0
        %v1261 = vpop.f32.mrb[0].mxu0
        %1262 = vdwg.mxu0
        %s1263 = scalar_lea.vmem [#allocation4], 16
        %1264 = vst.msk [vmem:[%s1263] sm:$0xff] %vm727, %v1258
        %s1265 = scalar_lea.vmem %s6, 48
        %v1266 = vld [vmem:[%s1265] sm:$0xf]
        %v1267 = vld [vmem:[%s1265 + $0x4] sm:$0xf]
        %v1268 = vld [vmem:[%s1265 + $0x8] sm:$0xf]
        %v1269 = vld [vmem:[%s1265 + $0xc] sm:$0xf]
        %s1270 = scalar_lea.vmem %s7, 3
        %v1271 = vld [vmem:[%s1270] sm:$0x1]
        %v1273 = vlaneseq
        %v1274 = vshrl.u32 %v1273, 7
        %v1275 = vsub.s32 0, %v1274
        %v1276 = vrot.slane %v1271, %v1275
        %v1282 = vunpack.c.l.b16 %v1266
        %v1283 = vunpack.c.l.b16 %v1267
        %v1284 = vunpack.c.l.b16 %v1268
        %v1285 = vunpack.c.l.b16 %v1269
        %v1286 = vpack.c.b16 %v1283, %v1282
        %v1287 = vpack.c.b16 %v1285, %v1284
        %1290 = vmatprep.subr.bf16.mxu0 0
        %1291 = vmatpush1.bf16.msra.mxu0 %v1286
        %1292 = vmatprep.subr.bf16.mxu0 0
        %1293 = vmatpush1.bf16.msra.mxu0 %v1287
        %1294 = vmatprep.subr.bf16.mxu0 0
        %1295 = vmatpush1.bf16.msra.mxu0 0
        %1296 = vmatprep.subr.bf16.mxu0 0
        %1297 = vmatpush1.bf16.msra.mxu0 0
        %1298 = vmatprep.subr.bf16.mxu0 0
        %1299 = vmatpush1.bf16.msra.mxu0 0
        %1300 = vmatprep.subr.bf16.mxu0 0
        %1301 = vmatpush1.bf16.msra.mxu0 0
        %1302 = vmatprep.subr.bf16.mxu0 0
        %1303 = vmatpush1.bf16.msra.mxu0 0
        %1304 = vmatprep.subr.bf16.mxu0 0
        %1305 = vmatpush1.bf16.msra.mxu0 0
        %1306 = vmatprep.subr.bf16.mxu0 0
        %1307 = vmatpush1.bf16.msra.mxu0 0
        %1308 = vmatprep.subr.bf16.mxu0 0
        %1309 = vmatpush1.bf16.msra.mxu0 0
        %1310 = vmatprep.subr.bf16.mxu0 0
        %1311 = vmatpush1.bf16.msra.mxu0 0
        %1312 = vmatprep.subr.bf16.mxu0 0
        %1313 = vmatpush1.bf16.msra.mxu0 0
        %1314 = vmatprep.subr.bf16.mxu0 0
        %1315 = vmatpush1.bf16.msra.mxu0 0
        %1316 = vmatprep.subr.bf16.mxu0 0
        %1317 = vmatpush1.bf16.msra.mxu0 0
        %1318 = vmatprep.subr.bf16.mxu0 0
        %1319 = vmatpush1.bf16.msra.mxu0 0
        %1320 = vmatprep.subr.bf16.mxu0 0
        %1321 = vmatpush1.bf16.msra.mxu0 0
        %1322 = vmatprep.mubr.bf16.mxu0 0
        %1323 = vmatmul.mubr.bf16.gmra.mrb[0].mxu0 %v685
        %v1324 = vpop.f32.mrb[0].mxu0
        %v1325 = vadd.f32 %v1276, %v1324
        %v1326 = vpop.f32.mrb[0].mxu0
        %v1327 = vpop.f32.mrb[0].mxu0
        %v1328 = vpop.f32.mrb[0].mxu0
        %1329 = vdwg.mxu0
        %s1330 = scalar_lea.vmem [#allocation2], 24
        %1331 = vst.msk [vmem:[%s1330] sm:$0xff] %vm727, %v1325
        %s1332 = scalar_lea.vmem %s8, 48
        %v1333 = vld [vmem:[%s1332] sm:$0xf]
        %v1334 = vld [vmem:[%s1332 + $0x4] sm:$0xf]
        %v1335 = vld [vmem:[%s1332 + $0x8] sm:$0xf]
        %v1336 = vld [vmem:[%s1332 + $0xc] sm:$0xf]
        %s1337 = scalar_lea.vmem %s9, 3
        %v1338 = vld [vmem:[%s1337] sm:$0x1]
        %v1340 = vlaneseq
        %v1341 = vshrl.u32 %v1340, 7
        %v1342 = vsub.s32 0, %v1341
        %v1343 = vrot.slane %v1338, %v1342
        %v1349 = vunpack.c.l.b16 %v1333
        %v1350 = vunpack.c.l.b16 %v1334
        %v1351 = vunpack.c.l.b16 %v1335
        %v1352 = vunpack.c.l.b16 %v1336
        %v1353 = vpack.c.b16 %v1350, %v1349
        %v1354 = vpack.c.b16 %v1352, %v1351
        %1357 = vmatprep.subr.bf16.mxu0 0
        %1358 = vmatpush1.bf16.msra.mxu0 %v1353
        %1359 = vmatprep.subr.bf16.mxu0 0
        %1360 = vmatpush1.bf16.msra.mxu0 %v1354
        %1361 = vmatprep.subr.bf16.mxu0 0
        %1362 = vmatpush1.bf16.msra.mxu0 0
        %1363 = vmatprep.subr.bf16.mxu0 0
        %1364 = vmatpush1.bf16.msra.mxu0 0
        %1365 = vmatprep.subr.bf16.mxu0 0
        %1366 = vmatpush1.bf16.msra.mxu0 0
        %1367 = vmatprep.subr.bf16.mxu0 0
        %1368 = vmatpush1.bf16.msra.mxu0 0
        %1369 = vmatprep.subr.bf16.mxu0 0
        %1370 = vmatpush1.bf16.msra.mxu0 0
        %1371 = vmatprep.subr.bf16.mxu0 0
        %1372 = vmatpush1.bf16.msra.mxu0 0
        %1373 = vmatprep.subr.bf16.mxu0 0
        %1374 = vmatpush1.bf16.msra.mxu0 0
        %1375 = vmatprep.subr.bf16.mxu0 0
        %1376 = vmatpush1.bf16.msra.mxu0 0
        %1377 = vmatprep.subr.bf16.mxu0 0
        %1378 = vmatpush1.bf16.msra.mxu0 0
        %1379 = vmatprep.subr.bf16.mxu0 0
        %1380 = vmatpush1.bf16.msra.mxu0 0
        %1381 = vmatprep.subr.bf16.mxu0 0
        %1382 = vmatpush1.bf16.msra.mxu0 0
        %1383 = vmatprep.subr.bf16.mxu0 0
        %1384 = vmatpush1.bf16.msra.mxu0 0
        %1385 = vmatprep.subr.bf16.mxu0 0
        %1386 = vmatpush1.bf16.msra.mxu0 0
        %1387 = vmatprep.subr.bf16.mxu0 0
        %1388 = vmatpush1.bf16.msra.mxu0 0
        %1389 = vmatprep.mubr.bf16.mxu0 0
        %1390 = vmatmul.mubr.bf16.gmra.mrb[0].mxu0 %v753
        %v1391 = vpop.f32.mrb[0].mxu0
        %v1392 = vadd.f32 %v1343, %v1391
        %v1393 = vpop.f32.mrb[0].mxu0
        %v1394 = vpop.f32.mrb[0].mxu0
        %v1395 = vpop.f32.mrb[0].mxu0
        %1396 = vdwg.mxu0
        %s1397 = scalar_lea.vmem [#allocation3], 24
        %1398 = vst.msk [vmem:[%s1397] sm:$0xff] %vm727, %v1392
        %s1399 = scalar_lea.vmem %s10, 48
        %v1400 = vld [vmem:[%s1399] sm:$0xf]
        %v1401 = vld [vmem:[%s1399 + $0x4] sm:$0xf]
        %v1402 = vld [vmem:[%s1399 + $0x8] sm:$0xf]
        %v1403 = vld [vmem:[%s1399 + $0xc] sm:$0xf]
        %s1404 = scalar_lea.vmem %s11, 3
        %v1405 = vld [vmem:[%s1404] sm:$0x1]
        %v1407 = vlaneseq
        %v1408 = vshrl.u32 %v1407, 7
        %v1409 = vsub.s32 0, %v1408
        %v1410 = vrot.slane %v1405, %v1409
        %v1416 = vunpack.c.l.b16 %v1400
        %v1417 = vunpack.c.l.b16 %v1401
        %v1418 = vunpack.c.l.b16 %v1402
        %v1419 = vunpack.c.l.b16 %v1403
        %v1420 = vpack.c.b16 %v1417, %v1416
        %v1421 = vpack.c.b16 %v1419, %v1418
        %1424 = vmatprep.subr.bf16.mxu0 0
        %1425 = vmatpush1.bf16.msra.mxu0 %v1420
        %1426 = vmatprep.subr.bf16.mxu0 0
        %1427 = vmatpush1.bf16.msra.mxu0 %v1421
        %1428 = vmatprep.subr.bf16.mxu0 0
        %1429 = vmatpush1.bf16.msra.mxu0 0
        %1430 = vmatprep.subr.bf16.mxu0 0
        %1431 = vmatpush1.bf16.msra.mxu0 0
        %1432 = vmatprep.subr.bf16.mxu0 0
        %1433 = vmatpush1.bf16.msra.mxu0 0
        %1434 = vmatprep.subr.bf16.mxu0 0
        %1435 = vmatpush1.bf16.msra.mxu0 0
        %1436 = vmatprep.subr.bf16.mxu0 0
        %1437 = vmatpush1.bf16.msra.mxu0 0
        %1438 = vmatprep.subr.bf16.mxu0 0
        %1439 = vmatpush1.bf16.msra.mxu0 0
        %1440 = vmatprep.subr.bf16.mxu0 0
        %1441 = vmatpush1.bf16.msra.mxu0 0
        %1442 = vmatprep.subr.bf16.mxu0 0
        %1443 = vmatpush1.bf16.msra.mxu0 0
        %1444 = vmatprep.subr.bf16.mxu0 0
        %1445 = vmatpush1.bf16.msra.mxu0 0
        %1446 = vmatprep.subr.bf16.mxu0 0
        %1447 = vmatpush1.bf16.msra.mxu0 0
        %1448 = vmatprep.subr.bf16.mxu0 0
        %1449 = vmatpush1.bf16.msra.mxu0 0
        %1450 = vmatprep.subr.bf16.mxu0 0
        %1451 = vmatpush1.bf16.msra.mxu0 0
        %1452 = vmatprep.subr.bf16.mxu0 0
        %1453 = vmatpush1.bf16.msra.mxu0 0
        %1454 = vmatprep.subr.bf16.mxu0 0
        %1455 = vmatpush1.bf16.msra.mxu0 0
        %1456 = vmatprep.mubr.bf16.mxu0 0
        %1457 = vmatmul.mubr.bf16.gmra.mrb[0].mxu0 %v820
        %v1458 = vpop.f32.mrb[0].mxu0
        %v1459 = vadd.f32 %v1410, %v1458
        %v1460 = vpop.f32.mrb[0].mxu0
        %v1461 = vpop.f32.mrb[0].mxu0
        %v1462 = vpop.f32.mrb[0].mxu0
        %1463 = vdwg.mxu0
        %s1464 = scalar_lea.vmem [#allocation4], 24
        %1465 = vst.msk [vmem:[%s1464] sm:$0xff] %vm727, %v1459
        %v1466 = vld [vmem:[#allocation2] sm:$0xff]
        %v1467 = vld [vmem:[#allocation2 + $0x8] sm:$0xff]
        %v1468 = vld [vmem:[#allocation2 + $0x10] sm:$0xff]
        %v1469 = vld [vmem:[#allocation2 + $0x18] sm:$0xff]
        %v1470 = vpack.c.bf16 %v1466, %v1466
        %v1471 = vpack.c.bf16 %v1467, %v1467
        %v1472 = vpack.c.bf16 %v1468, %v1468
        %v1473 = vpack.c.bf16 %v1469, %v1469
        %v1474 = vld [vmem:[#allocation3] sm:$0xff]
        %v1475 = vld [vmem:[#allocation3 + $0x8] sm:$0xff]
        %v1476 = vld [vmem:[#allocation3 + $0x10] sm:$0xff]
        %v1477 = vld [vmem:[#allocation3 + $0x18] sm:$0xff]
        %v1478 = vpack.c.bf16 %v1474, %v1474
        %v1479 = vpack.c.bf16 %v1475, %v1475
        %v1480 = vpack.c.bf16 %v1476, %v1476
        %v1481 = vpack.c.bf16 %v1477, %v1477
        %v1482 = vld [vmem:[#allocation4] sm:$0xff]
        %v1483 = vld [vmem:[#allocation4 + $0x8] sm:$0xff]
        %v1484 = vld [vmem:[#allocation4 + $0x10] sm:$0xff]
        %v1485 = vld [vmem:[#allocation4 + $0x18] sm:$0xff]
        %v1486 = vpack.c.bf16 %v1482, %v1482
        %v1487 = vpack.c.bf16 %v1483, %v1483
        %v1488 = vpack.c.bf16 %v1484, %v1484
        %v1489 = vpack.c.bf16 %v1485, %v1485
        %v1491 = vsel %vm727, %v1470, 0
        %v1494 = vsel %vm727, %v1478, 0
        %1496 = vmatprep.subr.bf16.mxu0 0
        %1497 = vmatpush1.bf16.xpose.msra.mxu0 %v1494
        %1498 = vmatprep.subr.bf16.mxu0 0
        %1499 = vmatpush1.bf16.xpose.msra.mxu0 0
        %1500 = vmatprep.subr.bf16.mxu0 0
        %1501 = vmatpush1.bf16.xpose.msra.mxu0 0
        %1502 = vmatprep.subr.bf16.mxu0 0
        %1503 = vmatpush1.bf16.xpose.msra.mxu0 0
        %1504 = vmatprep.subr.bf16.mxu0 0
        %1505 = vmatpush1.bf16.xpose.msra.mxu0 0
        %1506 = vmatprep.subr.bf16.mxu0 0
        %1507 = vmatpush1.bf16.xpose.msra.mxu0 0
        %1508 = vmatprep.subr.bf16.mxu0 0
        %1509 = vmatpush1.bf16.xpose.msra.mxu0 0
        %1510 = vmatprep.subr.bf16.mxu0 0
        %1511 = vmatpush1.bf16.xpose.msra.mxu0 0
        %1512 = vmatprep.subr.bf16.mxu0 0
        %1513 = vmatpush1.bf16.xpose.msra.mxu0 0
        %1514 = vmatprep.subr.bf16.mxu0 0
        %1515 = vmatpush1.bf16.xpose.msra.mxu0 0
        %1516 = vmatprep.subr.bf16.mxu0 0
        %1517 = vmatpush1.bf16.xpose.msra.mxu0 0
        %1518 = vmatprep.subr.bf16.mxu0 0
        %1519 = vmatpush1.bf16.xpose.msra.mxu0 0
        %1520 = vmatprep.subr.bf16.mxu0 0
        %1521 = vmatpush1.bf16.xpose.msra.mxu0 0
        %1522 = vmatprep.subr.bf16.mxu0 0
        %1523 = vmatpush1.bf16.xpose.msra.mxu0 0
        %1524 = vmatprep.subr.bf16.mxu0 0
        %1525 = vmatpush1.bf16.xpose.msra.mxu0 0
        %1526 = vmatprep.subr.bf16.mxu0 0
        %1527 = vmatpush1.bf16.xpose.msra.mxu0 0
        %1528 = vmatprep.mubr.bf16.mxu0 0
        %1529 = vmatmul.mubr.bf16.gmra.mrb[0].mxu0 %v1491
        %v1530 = vpop.f32.mrb[0].mxu0
        %v1531 = vadd.f32 0.0, %v1530
        %v1532 = vpop.f32.mrb[0].mxu0
        %v1533 = vpop.f32.mrb[0].mxu0
        %v1534 = vpop.f32.mrb[0].mxu0
        %1535 = vdwg.mxu0
        %v1537 = vsel %vm727, %v1471, 0
        %v1540 = vsel %vm727, %v1479, 0
        %1542 = vmatprep.subr.bf16.mxu0 0
        %1543 = vmatpush1.bf16.xpose.msra.mxu0 %v1540
        %1544 = vmatprep.subr.bf16.mxu0 0
        %1545 = vmatpush1.bf16.xpose.msra.mxu0 0
        %1546 = vmatprep.subr.bf16.mxu0 0
        %1547 = vmatpush1.bf16.xpose.msra.mxu0 0
        %1548 = vmatprep.subr.bf16.mxu0 0
        %1549 = vmatpush1.bf16.xpose.msra.mxu0 0
        %1550 = vmatprep.subr.bf16.mxu0 0
        %1551 = vmatpush1.bf16.xpose.msra.mxu0 0
        %1552 = vmatprep.subr.bf16.mxu0 0
        %1553 = vmatpush1.bf16.xpose.msra.mxu0 0
        %1554 = vmatprep.subr.bf16.mxu0 0
        %1555 = vmatpush1.bf16.xpose.msra.mxu0 0
        %1556 = vmatprep.subr.bf16.mxu0 0
        %1557 = vmatpush1.bf16.xpose.msra.mxu0 0
        %1558 = vmatprep.subr.bf16.mxu0 0
        %1559 = vmatpush1.bf16.xpose.msra.mxu0 0
        %1560 = vmatprep.subr.bf16.mxu0 0
        %1561 = vmatpush1.bf16.xpose.msra.mxu0 0
        %1562 = vmatprep.subr.bf16.mxu0 0
        %1563 = vmatpush1.bf16.xpose.msra.mxu0 0
        %1564 = vmatprep.subr.bf16.mxu0 0
        %1565 = vmatpush1.bf16.xpose.msra.mxu0 0
        %1566 = vmatprep.subr.bf16.mxu0 0
        %1567 = vmatpush1.bf16.xpose.msra.mxu0 0
        %1568 = vmatprep.subr.bf16.mxu0 0
        %1569 = vmatpush1.bf16.xpose.msra.mxu0 0
        %1570 = vmatprep.subr.bf16.mxu0 0
        %1571 = vmatpush1.bf16.xpose.msra.mxu0 0
        %1572 = vmatprep.subr.bf16.mxu0 0
        %1573 = vmatpush1.bf16.xpose.msra.mxu0 0
        %1574 = vmatprep.mubr.bf16.mxu0 0
        %1575 = vmatmul.mubr.bf16.gmra.mrb[0].mxu0 %v1537
        %v1576 = vpop.f32.mrb[0].mxu0
        %v1577 = vadd.f32 0.0, %v1576
        %v1578 = vpop.f32.mrb[0].mxu0
        %v1579 = vpop.f32.mrb[0].mxu0
        %v1580 = vpop.f32.mrb[0].mxu0
        %1581 = vdwg.mxu0
        %v1583 = vsel %vm727, %v1472, 0
        %v1586 = vsel %vm727, %v1480, 0
        %1588 = vmatprep.subr.bf16.mxu0 0
        %1589 = vmatpush1.bf16.xpose.msra.mxu0 %v1586
        %1590 = vmatprep.subr.bf16.mxu0 0
        %1591 = vmatpush1.bf16.xpose.msra.mxu0 0
        %1592 = vmatprep.subr.bf16.mxu0 0
        %1593 = vmatpush1.bf16.xpose.msra.mxu0 0
        %1594 = vmatprep.subr.bf16.mxu0 0
        %1595 = vmatpush1.bf16.xpose.msra.mxu0 0
        %1596 = vmatprep.subr.bf16.mxu0 0
        %1597 = vmatpush1.bf16.xpose.msra.mxu0 0
        %1598 = vmatprep.subr.bf16.mxu0 0
        %1599 = vmatpush1.bf16.xpose.msra.mxu0 0
        %1600 = vmatprep.subr.bf16.mxu0 0
        %1601 = vmatpush1.bf16.xpose.msra.mxu0 0
        %1602 = vmatprep.subr.bf16.mxu0 0
        %1603 = vmatpush1.bf16.xpose.msra.mxu0 0
        %1604 = vmatprep.subr.bf16.mxu0 0
        %1605 = vmatpush1.bf16.xpose.msra.mxu0 0
        %1606 = vmatprep.subr.bf16.mxu0 0
        %1607 = vmatpush1.bf16.xpose.msra.mxu0 0
        %1608 = vmatprep.subr.bf16.mxu0 0
        %1609 = vmatpush1.bf16.xpose.msra.mxu0 0
        %1610 = vmatprep.subr.bf16.mxu0 0
        %1611 = vmatpush1.bf16.xpose.msra.mxu0 0
        %1612 = vmatprep.subr.bf16.mxu0 0
        %1613 = vmatpush1.bf16.xpose.msra.mxu0 0
        %1614 = vmatprep.subr.bf16.mxu0 0
        %1615 = vmatpush1.bf16.xpose.msra.mxu0 0
        %1616 = vmatprep.subr.bf16.mxu0 0
        %1617 = vmatpush1.bf16.xpose.msra.mxu0 0
        %1618 = vmatprep.subr.bf16.mxu0 0
        %1619 = vmatpush1.bf16.xpose.msra.mxu0 0
        %1620 = vmatprep.mubr.bf16.mxu0 0
        %1621 = vmatmul.mubr.bf16.gmra.mrb[0].mxu0 %v1583
        %v1622 = vpop.f32.mrb[0].mxu0
        %v1623 = vadd.f32 0.0, %v1622
        %v1624 = vpop.f32.mrb[0].mxu0
        %v1625 = vpop.f32.mrb[0].mxu0
        %v1626 = vpop.f32.mrb[0].mxu0
        %1627 = vdwg.mxu0
        %v1629 = vsel %vm727, %v1473, 0
        %v1632 = vsel %vm727, %v1481, 0
        %1634 = vmatprep.subr.bf16.mxu0 0
        %1635 = vmatpush1.bf16.xpose.msra.mxu0 %v1632
        %1636 = vmatprep.subr.bf16.mxu0 0
        %1637 = vmatpush1.bf16.xpose.msra.mxu0 0
        %1638 = vmatprep.subr.bf16.mxu0 0
        %1639 = vmatpush1.bf16.xpose.msra.mxu0 0
        %1640 = vmatprep.subr.bf16.mxu0 0
        %1641 = vmatpush1.bf16.xpose.msra.mxu0 0
        %1642 = vmatprep.subr.bf16.mxu0 0
        %1643 = vmatpush1.bf16.xpose.msra.mxu0 0
        %1644 = vmatprep.subr.bf16.mxu0 0
        %1645 = vmatpush1.bf16.xpose.msra.mxu0 0
        %1646 = vmatprep.subr.bf16.mxu0 0
        %1647 = vmatpush1.bf16.xpose.msra.mxu0 0
        %1648 = vmatprep.subr.bf16.mxu0 0
        %1649 = vmatpush1.bf16.xpose.msra.mxu0 0
        %1650 = vmatprep.subr.bf16.mxu0 0
        %1651 = vmatpush1.bf16.xpose.msra.mxu0 0
        %1652 = vmatprep.subr.bf16.mxu0 0
        %1653 = vmatpush1.bf16.xpose.msra.mxu0 0
        %1654 = vmatprep.subr.bf16.mxu0 0
        %1655 = vmatpush1.bf16.xpose.msra.mxu0 0
        %1656 = vmatprep.subr.bf16.mxu0 0
        %1657 = vmatpush1.bf16.xpose.msra.mxu0 0
        %1658 = vmatprep.subr.bf16.mxu0 0
        %1659 = vmatpush1.bf16.xpose.msra.mxu0 0
        %1660 = vmatprep.subr.bf16.mxu0 0
        %1661 = vmatpush1.bf16.xpose.msra.mxu0 0
        %1662 = vmatprep.subr.bf16.mxu0 0
        %1663 = vmatpush1.bf16.xpose.msra.mxu0 0
        %1664 = vmatprep.subr.bf16.mxu0 0
        %1665 = vmatpush1.bf16.xpose.msra.mxu0 0
        %1666 = vmatprep.mubr.bf16.mxu0 0
        %1667 = vmatmul.mubr.bf16.gmra.mrb[0].mxu0 %v1629
        %v1668 = vpop.f32.mrb[0].mxu0
        %v1669 = vadd.f32 0.0, %v1668
        %v1670 = vpop.f32.mrb[0].mxu0
        %v1671 = vpop.f32.mrb[0].mxu0
        %v1672 = vpop.f32.mrb[0].mxu0
        %1673 = vdwg.mxu0
        %v1674 = vsel %vm727, %v1531, -inf
        %1675 = vmax.xlane.f32.xlu0 %v1674
        %v1676 = vpop.xlane.xlu0 %1675
        %v1677 = vsel %vm727, %v1577, -inf
        %1678 = vmax.xlane.f32.xlu0 %v1677
        %v1679 = vpop.xlane.xlu0 %1678
        %v1680 = vsel %vm727, %v1623, -inf
        %1681 = vmax.xlane.f32.xlu0 %v1680
        %v1682 = vpop.xlane.xlu0 %1681
        %v1683 = vsel %vm727, %v1669, -inf
        %1684 = vmax.xlane.f32.xlu0 %v1683
        %v1685 = vpop.xlane.xlu0 %1684
        %v1686 = vsub.f32 %v1531, %v1676
        %v1687 = vsub.f32 %v1577, %v1679
        %v1688 = vsub.f32 %v1623, %v1682
        %v1689 = vsub.f32 %v1669, %v1685
        %v1690 = vmul.f32 %v1686, 1.442695
        %v1691 = vpow.pop %v1690
        %v1692 = vmul.f32 %v1687, 1.442695
        %v1693 = vpow.pop %v1692
        %v1694 = vmul.f32 %v1688, 1.442695
        %v1695 = vpow.pop %v1694
        %v1696 = vmul.f32 %v1689, 1.442695
        %v1697 = vpow.pop %v1696
        %v1698 = vsel %vm727, %v1691, 0.0
        %1699 = vadd.xlane.f32.xlu0 %v1698
        %v1700 = vpop.xlane.xlu0 %1699
        %v1701 = vsel %vm727, %v1693, 0.0
        %1702 = vadd.xlane.f32.xlu0 %v1701
        %v1703 = vpop.xlane.xlu0 %1702
        %v1704 = vsel %vm727, %v1695, 0.0
        %1705 = vadd.xlane.f32.xlu0 %v1704
        %v1706 = vpop.xlane.xlu0 %1705
        %v1707 = vsel %vm727, %v1697, 0.0
        %1708 = vadd.xlane.f32.xlu0 %v1707
        %v1709 = vpop.xlane.xlu0 %1708
        %v1710 = vpack.c.bf16 %v1691, %v1691
        %v1711 = vpack.c.bf16 %v1693, %v1693
        %v1712 = vpack.c.bf16 %v1695, %v1695
        %v1713 = vpack.c.bf16 %v1697, %v1697
        %v1715 = vsel %vm727, %v1710, 0
        %vm1717 = vcmask 1043456
        %v1719 = vsel %vm1717, %v1486, 0
        %1721 = vmatprep.subr.bf16.mxu0 0
        %1722 = vmatpush1.bf16.msra.mxu0 %v1719
        %1723 = vmatprep.subr.bf16.mxu0 0
        %1724 = vmatpush1.bf16.msra.mxu0 0
        %1725 = vmatprep.subr.bf16.mxu0 0
        %1726 = vmatpush1.bf16.msra.mxu0 0
        %1727 = vmatprep.subr.bf16.mxu0 0
        %1728 = vmatpush1.bf16.msra.mxu0 0
        %1729 = vmatprep.subr.bf16.mxu0 0
        %1730 = vmatpush1.bf16.msra.mxu0 0
        %1731 = vmatprep.subr.bf16.mxu0 0
        %1732 = vmatpush1.bf16.msra.mxu0 0
        %1733 = vmatprep.subr.bf16.mxu0 0
        %1734 = vmatpush1.bf16.msra.mxu0 0
        %1735 = vmatprep.subr.bf16.mxu0 0
        %1736 = vmatpush1.bf16.msra.mxu0 0
        %1737 = vmatprep.subr.bf16.mxu0 0
        %1738 = vmatpush1.bf16.msra.mxu0 0
        %1739 = vmatprep.subr.bf16.mxu0 0
        %1740 = vmatpush1.bf16.msra.mxu0 0
        %1741 = vmatprep.subr.bf16.mxu0 0
        %1742 = vmatpush1.bf16.msra.mxu0 0
        %1743 = vmatprep.subr.bf16.mxu0 0
        %1744 = vmatpush1.bf16.msra.mxu0 0
        %1745 = vmatprep.subr.bf16.mxu0 0
        %1746 = vmatpush1.bf16.msra.mxu0 0
        %1747 = vmatprep.subr.bf16.mxu0 0
        %1748 = vmatpush1.bf16.msra.mxu0 0
        %1749 = vmatprep.subr.bf16.mxu0 0
        %1750 = vmatpush1.bf16.msra.mxu0 0
        %1751 = vmatprep.subr.bf16.mxu0 0
        %1752 = vmatpush1.bf16.msra.mxu0 0
        %1753 = vmatprep.mubr.bf16.mxu0 0
        %1754 = vmatmul.mubr.bf16.gmra.mrb[0].mxu0 %v1715
        %v1755 = vpop.f32.mrb[0].mxu0
        %v1756 = vadd.f32 0.0, %v1755
        %v1757 = vpop.f32.mrb[0].mxu0
        %v1758 = vpop.f32.mrb[0].mxu0
        %v1759 = vpop.f32.mrb[0].mxu0
        %1760 = vdwg.mxu0
        %v1762 = vsel %vm727, %v1711, 0
        %v1765 = vsel %vm1717, %v1487, 0
        %1767 = vmatprep.subr.bf16.mxu0 0
        %1768 = vmatpush1.bf16.msra.mxu0 %v1765
        %1769 = vmatprep.subr.bf16.mxu0 0
        %1770 = vmatpush1.bf16.msra.mxu0 0
        %1771 = vmatprep.subr.bf16.mxu0 0
        %1772 = vmatpush1.bf16.msra.mxu0 0
        %1773 = vmatprep.subr.bf16.mxu0 0
        %1774 = vmatpush1.bf16.msra.mxu0 0
        %1775 = vmatprep.subr.bf16.mxu0 0
        %1776 = vmatpush1.bf16.msra.mxu0 0
        %1777 = vmatprep.subr.bf16.mxu0 0
        %1778 = vmatpush1.bf16.msra.mxu0 0
        %1779 = vmatprep.subr.bf16.mxu0 0
        %1780 = vmatpush1.bf16.msra.mxu0 0
        %1781 = vmatprep.subr.bf16.mxu0 0
        %1782 = vmatpush1.bf16.msra.mxu0 0
        %1783 = vmatprep.subr.bf16.mxu0 0
        %1784 = vmatpush1.bf16.msra.mxu0 0
        %1785 = vmatprep.subr.bf16.mxu0 0
        %1786 = vmatpush1.bf16.msra.mxu0 0
        %1787 = vmatprep.subr.bf16.mxu0 0
        %1788 = vmatpush1.bf16.msra.mxu0 0
        %1789 = vmatprep.subr.bf16.mxu0 0
        %1790 = vmatpush1.bf16.msra.mxu0 0
        %1791 = vmatprep.subr.bf16.mxu0 0
        %1792 = vmatpush1.bf16.msra.mxu0 0
        %1793 = vmatprep.subr.bf16.mxu0 0
        %1794 = vmatpush1.bf16.msra.mxu0 0
        %1795 = vmatprep.subr.bf16.mxu0 0
        %1796 = vmatpush1.bf16.msra.mxu0 0
        %1797 = vmatprep.subr.bf16.mxu0 0
        %1798 = vmatpush1.bf16.msra.mxu0 0
        %1799 = vmatprep.mubr.bf16.mxu0 0
        %1800 = vmatmul.mubr.bf16.gmra.mrb[0].mxu0 %v1762
        %v1801 = vpop.f32.mrb[0].mxu0
        %v1802 = vadd.f32 0.0, %v1801
        %v1803 = vpop.f32.mrb[0].mxu0
        %v1804 = vpop.f32.mrb[0].mxu0
        %v1805 = vpop.f32.mrb[0].mxu0
        %1806 = vdwg.mxu0
        %v1808 = vsel %vm727, %v1712, 0
        %v1811 = vsel %vm1717, %v1488, 0
        %1813 = vmatprep.subr.bf16.mxu0 0
        %1814 = vmatpush1.bf16.msra.mxu0 %v1811
        %1815 = vmatprep.subr.bf16.mxu0 0
        %1816 = vmatpush1.bf16.msra.mxu0 0
        %1817 = vmatprep.subr.bf16.mxu0 0
        %1818 = vmatpush1.bf16.msra.mxu0 0
        %1819 = vmatprep.subr.bf16.mxu0 0
        %1820 = vmatpush1.bf16.msra.mxu0 0
        %1821 = vmatprep.subr.bf16.mxu0 0
        %1822 = vmatpush1.bf16.msra.mxu0 0
        %1823 = vmatprep.subr.bf16.mxu0 0
        %1824 = vmatpush1.bf16.msra.mxu0 0
        %1825 = vmatprep.subr.bf16.mxu0 0
        %1826 = vmatpush1.bf16.msra.mxu0 0
        %1827 = vmatprep.subr.bf16.mxu0 0
        %1828 = vmatpush1.bf16.msra.mxu0 0
        %1829 = vmatprep.subr.bf16.mxu0 0
        %1830 = vmatpush1.bf16.msra.mxu0 0
        %1831 = vmatprep.subr.bf16.mxu0 0
        %1832 = vmatpush1.bf16.msra.mxu0 0
        %1833 = vmatprep.subr.bf16.mxu0 0
        %1834 = vmatpush1.bf16.msra.mxu0 0
        %1835 = vmatprep.subr.bf16.mxu0 0
        %1836 = vmatpush1.bf16.msra.mxu0 0
        %1837 = vmatprep.subr.bf16.mxu0 0
        %1838 = vmatpush1.bf16.msra.mxu0 0
        %1839 = vmatprep.subr.bf16.mxu0 0
        %1840 = vmatpush1.bf16.msra.mxu0 0
        %1841 = vmatprep.subr.bf16.mxu0 0
        %1842 = vmatpush1.bf16.msra.mxu0 0
        %1843 = vmatprep.subr.bf16.mxu0 0
        %1844 = vmatpush1.bf16.msra.mxu0 0
        %1845 = vmatprep.mubr.bf16.mxu0 0
        %1846 = vmatmul.mubr.bf16.gmra.mrb[0].mxu0 %v1808
        %v1847 = vpop.f32.mrb[0].mxu0
        %v1848 = vadd.f32 0.0, %v1847
        %v1849 = vpop.f32.mrb[0].mxu0
        %v1850 = vpop.f32.mrb[0].mxu0
        %v1851 = vpop.f32.mrb[0].mxu0
        %1852 = vdwg.mxu0
        %v1854 = vsel %vm727, %v1713, 0
        %v1857 = vsel %vm1717, %v1489, 0
        %1859 = vmatprep.subr.bf16.mxu0 0
        %1860 = vmatpush1.bf16.msra.mxu0 %v1857
        %1861 = vmatprep.subr.bf16.mxu0 0
        %1862 = vmatpush1.bf16.msra.mxu0 0
        %1863 = vmatprep.subr.bf16.mxu0 0
        %1864 = vmatpush1.bf16.msra.mxu0 0
        %1865 = vmatprep.subr.bf16.mxu0 0
        %1866 = vmatpush1.bf16.msra.mxu0 0
        %1867 = vmatprep.subr.bf16.mxu0 0
        %1868 = vmatpush1.bf16.msra.mxu0 0
        %1869 = vmatprep.subr.bf16.mxu0 0
        %1870 = vmatpush1.bf16.msra.mxu0 0
        %1871 = vmatprep.subr.bf16.mxu0 0
        %1872 = vmatpush1.bf16.msra.mxu0 0
        %1873 = vmatprep.subr.bf16.mxu0 0
        %1874 = vmatpush1.bf16.msra.mxu0 0
        %1875 = vmatprep.subr.bf16.mxu0 0
        %1876 = vmatpush1.bf16.msra.mxu0 0
        %1877 = vmatprep.subr.bf16.mxu0 0
        %1878 = vmatpush1.bf16.msra.mxu0 0
        %1879 = vmatprep.subr.bf16.mxu0 0
        %1880 = vmatpush1.bf16.msra.mxu0 0
        %1881 = vmatprep.subr.bf16.mxu0 0
        %1882 = vmatpush1.bf16.msra.mxu0 0
        %1883 = vmatprep.subr.bf16.mxu0 0
        %1884 = vmatpush1.bf16.msra.mxu0 0
        %1885 = vmatprep.subr.bf16.mxu0 0
        %1886 = vmatpush1.bf16.msra.mxu0 0
        %1887 = vmatprep.subr.bf16.mxu0 0
        %1888 = vmatpush1.bf16.msra.mxu0 0
        %1889 = vmatprep.subr.bf16.mxu0 0
        %1890 = vmatpush1.bf16.msra.mxu0 0
        %1891 = vmatprep.mubr.bf16.mxu0 0
        %1892 = vmatmul.mubr.bf16.gmra.mrb[0].mxu0 %v1854
        %v1893 = vpop.f32.mrb[0].mxu0
        %v1894 = vadd.f32 0.0, %v1893
        %v1895 = vpop.f32.mrb[0].mxu0
        %v1896 = vpop.f32.mrb[0].mxu0
        %v1897 = vpop.f32.mrb[0].mxu0
        %1898 = vdwg.mxu0
        %v1899 = vrcp.pop %v1700
        %v1900 = vrcp.pop %v1703
        %v1901 = vrcp.pop %v1706
        %v1902 = vrcp.pop %v1709
        %v1903 = vmul.f32 %v1756, %v1899
        %v1904 = vmul.f32 %v1802, %v1900
        %v1905 = vmul.f32 %v1848, %v1901
        %v1906 = vmul.f32 %v1894, %v1902
        %v1907 = vpack.c.bf16 %v1903, %v1903
        %v1908 = vpack.c.bf16 %v1904, %v1904
        %v1909 = vpack.c.bf16 %v1905, %v1905
        %v1910 = vpack.c.bf16 %v1906, %v1906
        %vm1911 = vcmask 60416
        %1912 = vst.msk [vmem:[#allocation5] sm:$0xf] %vm1911, %v1907
        %v1914 = vunpack.c.l.b16 %v1908
        %v1915 = vpack.c.b16 %v1914, %v1914
        %1916 = vrot.lane.b32.xlu0 %v1915, 8
        %v1917 = vpop.permute.xlu0 %1916
        %vm1919 = vcmask 126016
        %1920 = vst.msk [vmem:[#allocation5] sm:$0xf] %vm1919, %v1917
        %v1922 = vunpack.c.l.b16 %v1909
        %v1923 = vpack.c.b16 %v1922, %v1922
        %1924 = vrot.lane.b32.xlu0 %v1923, 16
        %v1925 = vpop.permute.xlu0 %1924
        %vm1927 = vcmask 191616
        %1928 = vst.msk [vmem:[#allocation5] sm:$0xf] %vm1927, %v1925
        %v1930 = vunpack.c.l.b16 %v1910
        %v1931 = vpack.c.b16 %v1930, %v1930
        %1932 = vrot.lane.b32.xlu0 %v1931, 24
        %v1933 = vpop.permute.xlu0 %1932
        %vm1935 = vcmask 257216
        %1936 = vst.msk [vmem:[#allocation5] sm:$0xf] %vm1935, %v1933
        %v1937 = vld [vmem:[#allocation5] sm:$0xf]
        %v1938 = vld [vmem:[%s12] sm:$0xf]
        %v1939 = vld [vmem:[%s12 + $0x4] sm:$0xf]
        %v1940 = vld [vmem:[%s12 + $0x8] sm:$0xf]
        %v1941 = vld [vmem:[%s12 + $0xc] sm:$0xf]
        %v1942 = vld [vmem:[%s13] sm:$0x1]
        %v1944 = vlaneseq
        %v1945 = vshrl.u32 %v1944, 7
        %v1946 = vsub.s32 0, %v1945
        %v1947 = vrot.slane %v1942, %v1946
        %v1953 = vunpack.c.l.b16 %v1938
        %v1954 = vunpack.c.l.b16 %v1939
        %v1955 = vunpack.c.l.b16 %v1940
        %v1956 = vunpack.c.l.b16 %v1941
        %v1957 = vpack.c.b16 %v1954, %v1953
        %v1958 = vpack.c.b16 %v1956, %v1955
        %v1962 = vsel %vm683, %v1937, 0
        %1964 = vmatprep.subr.bf16.mxu0 0
        %1965 = vmatpush1.bf16.msra.mxu0 %v1957
        %1966 = vmatprep.subr.bf16.mxu0 0
        %1967 = vmatpush1.bf16.msra.mxu0 %v1958
        %1968 = vmatprep.subr.bf16.mxu0 0
        %1969 = vmatpush1.bf16.msra.mxu0 0
        %1970 = vmatprep.subr.bf16.mxu0 0
        %1971 = vmatpush1.bf16.msra.mxu0 0
        %1972 = vmatprep.subr.bf16.mxu0 0
        %1973 = vmatpush1.bf16.msra.mxu0 0
        %1974 = vmatprep.subr.bf16.mxu0 0
        %1975 = vmatpush1.bf16.msra.mxu0 0
        %1976 = vmatprep.subr.bf16.mxu0 0
        %1977 = vmatpush1.bf16.msra.mxu0 0
        %1978 = vmatprep.subr.bf16.mxu0 0
        %1979 = vmatpush1.bf16.msra.mxu0 0
        %1980 = vmatprep.subr.bf16.mxu0 0
        %1981 = vmatpush1.bf16.msra.mxu0 0
        %1982 = vmatprep.subr.bf16.mxu0 0
        %1983 = vmatpush1.bf16.msra.mxu0 0
        %1984 = vmatprep.subr.bf16.mxu0 0
        %1985 = vmatpush1.bf16.msra.mxu0 0
        %1986 = vmatprep.subr.bf16.mxu0 0
        %1987 = vmatpush1.bf16.msra.mxu0 0
        %1988 = vmatprep.subr.bf16.mxu0 0
        %1989 = vmatpush1.bf16.msra.mxu0 0
        %1990 = vmatprep.subr.bf16.mxu0 0
        %1991 = vmatpush1.bf16.msra.mxu0 0
        %1992 = vmatprep.subr.bf16.mxu0 0
        %1993 = vmatpush1.bf16.msra.mxu0 0
        %1994 = vmatprep.subr.bf16.mxu0 0
        %1995 = vmatpush1.bf16.msra.mxu0 0
        %1996 = vmatprep.mubr.bf16.mxu0 0
        %1997 = vmatmul.mubr.bf16.gmra.mrb[0].mxu0 %v1962
        %v1998 = vpop.f32.mrb[0].mxu0
        %v1999 = vadd.f32 %v1947, %v1998
        %v2000 = vpop.f32.mrb[0].mxu0
        %v2001 = vpop.f32.mrb[0].mxu0
        %v2002 = vpop.f32.mrb[0].mxu0
        %2003 = vdwg.mxu0
        %v2004 = vld [vmem:[%s648] sm:$0xff]
        %v2005 = vadd.f32 %v2004, %v1999
        %v2006 = vsel %vm683, %v2005, 0.0
        %2007 = vadd.xlane.f32.xlu0 %v2006
        %v2008 = vpop.xlane.xlu0 %2007
        %v2009 = vrcp.pop 32.0
        %v2010 = vmul.f32 %v2008, %v2009
        %v2011 = vsub.f32 %v2005, %v2010
        %v2012 = vmul.f32 %v2011, %v2011
        %v2013 = vsel %vm683, %v2012, 0.0
        %2014 = vadd.xlane.f32.xlu0 %v2013
        %v2015 = vpop.xlane.xlu0 %2014
        %v2016 = vmul.f32 %v2015, %v2009
        %v2017 = vadd.f32 %v2016, 1e-05
        %v2018 = vrsqrt.pop %v2017
        %v2019 = vmul.f32 %v2011, %v2018
        %v2020 = vld [vmem:[%s14] sm:$0x1]
        %v2022 = vlaneseq
        %v2023 = vshrl.u32 %v2022, 7
        %v2024 = vsub.s32 0, %v2023
        %v2025 = vrot.slane %v2020, %v2024
        %v2027 = vmul.f32 %v2019, %v2025
        %v2028 = vld [vmem:[%s15] sm:$0x1]
        %v2030 = vlaneseq
        %v2031 = vshrl.u32 %v2030, 7
        %v2032 = vsub.s32 0, %v2031
        %v2033 = vrot.slane %v2028, %v2032
        %v2035 = vadd.f32 %v2027, %v2033
        %2036 = vst.msk [vmem:[%s615] sm:$0xff] %vm683, %v2035
        %s2037 = sand.u32 %s424, 1
        %s2038 = scalar_lea.sflag [#allocation7], %s2037
        %s2039 = sand.u32 %s424, 1
        %s2040 = smul.addr %s2039, 8
        %s2041 = scalar_lea.vmem [#allocation6], %s2040
        // Predicated region
        $region85: #{tpu_custom_call.1} parent=83 // pred_check
          %p2042 = pneg %p434
        $region86: #{tpu_custom_call.1} parent=83 // pred_check_branch
          %2044 = sbr.rel (%p2042) target = $region88
        $region87: #{tpu_custom_call.1} parent=83 // pred_region
          %s2046 = ssub.s32 128, 128
          %2047 = vsyncadd %s2038, %s2046
          %s2048 = sadd.s32 %s35, %s34
          %s2049 = smul.addr %s2048, 128
          %s2050 = scalar_lea.hbm %s16, %s2049
          %s2052 = sshll.u32 %s2041, 4
          %s2053 = int_to_ptr.vmem [resolvable:$true] %s2052
          %2055 = dma.vmem_to_hbm [thread:$0]  %s2053, 128, %s2050, %s2038
        $region88: #{tpu_custom_call.1} parent=83 // pred_fallthru
          _
      $region84: #{tpu_custom_call.1} parent=5 // pred_fallthru
        _
      %p2056 = scmp.le.s32.totalorder 2, %s25
      // Predicated region
      $region89: #{tpu_custom_call.1} parent=5 // pred_check
        %p2057 = pneg %p2056
      $region90: #{tpu_custom_call.1} parent=5 // pred_check_branch
        %2059 = sbr.rel (%p2057) target = $region92
      $region91: #{tpu_custom_call.1} parent=5 // pred_region
        %s2060 = ssub.s32 %s25, 2
        // Predicated region
        $region93: #{tpu_custom_call.1} parent=91 // pred_check
          %p2061 = pneg %p440
        $region94: #{tpu_custom_call.1} parent=91 // pred_check_branch
          %2063 = sbr.rel (%p2061) target = $region96
        $region95: #{tpu_custom_call.1} parent=91 // pred_region
          %s2064 = sand.u32 %s425, 1
          %s2065 = scalar_lea.sflag [#allocation7], %s2064
          %s2066 = sand.u32 %s425, 1
          %s2067 = smul.addr %s2066, 8
          %s2068 = scalar_lea.vmem [#allocation6], %s2067
          %2069 = dma.done %s2065, 128
        $region96: #{tpu_custom_call.1} parent=91 // pred_fallthru
          _
      $region92: #{tpu_custom_call.1} parent=5 // pred_fallthru
        _
    $region6: #{tpu_custom_call.1} parent=1 // loop_footer
      %s29 = sadd.s32 1, %s25
    $region7: #{tpu_custom_call.1} parent=1 // loop_footer_branch
      %24 = sbr.rel target = $region3
    $region8: #{tpu_custom_call.1} parent=1 // loop_exit
      _
    %2070 = vsyncpa [#allocation7], 1
    %s2071 = scalar_lea.sflag [#allocation7], 1
    %2072 = vsyncpa %s2071, 1

</llo_original>
